<compile_context>
chip_gen: v6e
topology: v6e:2x2x1
jax: 0.10.0
libtpu: 0.0.40
codegen_flags: <defaults>
</compile_context>

<pallas_src>
import functools

import numpy as np
import jax
import jax.numpy as jnp
from jax.experimental import pallas as pl
from jax.experimental.pallas import tpu as pltpu


def cnn_kernel(compute_dtype, ids_ref, table_ref, w_ref, b_ref, mask_ref,
               wfc_ref, bfc_ref, out_ref):
    """Fused embed -> merged conv -> ReLU -> masked max-pool -> FC, one batch block.

    ids_ref  : (TB*S, 1) int32  token ids, flat row = b*S + s
    table_ref: (V, E)           embedding table
    w_ref    : (max_fs, E, NF)  merged conv weight (zero-padded along fs)
    b_ref    : (1, NF)          merged conv bias
    mask_ref : (S, NF) f32      additive mask: 0 at valid conv positions, -1e30 else
    wfc_ref  : (NF, O), bfc_ref: (1, O)
    out_ref  : (TB, O)
    """
    R = ids_ref.shape[0]
    V, E = table_ref.shape
    max_fs, _, NF = w_ref.shape
    S = mask_ref.shape[0]
    TB = R // S

    # ---- Embedding gather fused in-kernel as a one-hot MXU matmul ----
    # TODO(synk): for production vocab sizes switch to jnp.take / DMA gather;
    # with V=64 the one-hot matmul is the cheapest, guaranteed-lowering option.
    ids = ids_ref[...]                                            # (R, 1) int32
    iota_v = jax.lax.broadcasted_iota(jnp.int32, (R, V), 1)
    onehot = (ids == iota_v).astype(jnp.float32).astype(compute_dtype)   # (R, V)
    table = table_ref[...].astype(compute_dtype)
    emb = jnp.dot(onehot, table,
                  preferred_element_type=jnp.float32).astype(compute_dtype)  # (R, E)

    # ---- Merged conv: all filter sizes at once, one lane-dense (R, 48) slab ----
    # conv[r, :] = sum_k emb[r+k] @ W[k]; rows shifted past the end are zero-padded.
    # Cross-batch / out-of-range contributions hit zero-padded weights or are
    # masked to -1e30 before the max-pool, so they never affect the result.
    acc = jnp.zeros((R, NF), jnp.float32)
    for k in range(max_fs):                       # static, small (max_fs = 5)
        if k == 0:
            shifted = emb
        else:
            shifted = jnp.concatenate(
                [emb[k:, :], jnp.zeros((k, E), emb.dtype)], axis=0)
        acc += jnp.dot(shifted, w_ref[k].astype(compute_dtype),
                       preferred_element_type=jnp.float32)

    # ---- f32 epilogue: bias + ReLU + masked max-over-time (native VALU on v5e) ----
    conv = jnp.maximum(acc + b_ref[...].astype(jnp.float32), 0.0)        # (R, NF)
    conv = conv.reshape(TB, S, NF) + mask_ref[...][None, :, :]           # mask invalid pos
    pooled = jnp.max(conv, axis=1)                                       # (TB, NF)

    # ---- Fused FC (single K=NF matmul); dropout == identity (eval mode) ----
    out = jnp.dot(pooled.astype(compute_dtype), wfc_ref[...].astype(compute_dtype),
                  preferred_element_type=jnp.float32)
    out_ref[...] = (out + bfc_ref[...].astype(jnp.float32)).astype(out_ref.dtype)


def cnn_forward(x_tokens, params, filter_sizes, *, block_batch=8,
                compute_dtype=jnp.float32):
    emb_table, conv_params, wfc, bfc = params
    ids = x_tokens.T.astype(jnp.int32)                   # (B, S) == x.permute(1, 0)
    B, S = ids.shape
    V, E = emb_table.shape
    nf = conv_params[0][0].shape[-1]
    max_fs = max(filter_sizes)
    NF = len(filter_sizes) * nf
    O = wfc.shape[-1]

    # Merge per-filter-size conv weights into one lane-dense (max_fs, E, NF) weight
    # (zero-padded along fs) + (1, NF) bias; column order == torch.cat(pooled) order.
    w_blocks, b_blocks = [], []
    for (w, b), fs in zip(conv_params, filter_sizes):
        pad = jnp.zeros((max_fs - fs,) + w.shape[1:], w.dtype)
        w_blocks.append(jnp.concatenate([w, pad], axis=0))
        b_blocks.append(b)
    w_all = jnp.concatenate(w_blocks, axis=-1)           # (max_fs, E, NF)
    b_all = jnp.concatenate(b_blocks, axis=-1)           # (1, NF)

    # Additive mask: conv position s is valid for filter size fs iff s <= S - fs.
    neg = np.zeros((S, NF), np.float32)
    for i, fs in enumerate(filter_sizes):
        neg[S - fs + 1:, i * nf:(i + 1) * nf] = -1e30
    neg_mask = jnp.asarray(neg)

    TB = min(block_batch, B)
    assert B % TB == 0 and (TB % 8 == 0 or TB == B), (B, TB)
    ids_flat = ids.reshape(B * S, 1)                     # flat row = b*S + s

    kern = functools.partial(cnn_kernel, compute_dtype)
    # NOTE: at production B/S/E sizes, also set vmem_limit_bytes in CompilerParams
    # and shrink TB so 2x-double-buffered blocks fit v7x's 64 MiB VMEM.
    return pl.pallas_call(
        kern,
        out_shape=jax.ShapeDtypeStruct((B, O), jnp.float32),
        grid=(pl.cdiv(B, TB),),
        in_specs=[
            pl.BlockSpec((TB * S, 1), lambda i: (i, 0)),        # token ids (batch-tiled)
            pl.BlockSpec((V, E), lambda i: (0, 0)),             # embedding table
            pl.BlockSpec((max_fs, E, NF), lambda i: (0, 0, 0)),  # merged conv weight
            pl.BlockSpec((1, NF), lambda i: (0, 0)),            # merged conv bias
            pl.BlockSpec((S, NF), lambda i: (0, 0)),            # validity mask
            pl.BlockSpec((NF, O), lambda i: (0, 0)),            # fc weight
            pl.BlockSpec((1, O), lambda i: (0, 0)),             # fc bias
        ],
        out_specs=pl.BlockSpec((TB, O), lambda i: (i, 0)),
        compiler_params=pltpu.CompilerParams(
            dimension_semantics=("parallel",)),                 # v7x: 2 TCs split batch
    )(ids_flat, emb_table, w_all, b_all, neg_mask, wfc, bfc)


def cnn_reference(x_tokens, params, filter_sizes):
    """Pure-JAX reference mirroring the PyTorch forward (eval mode)."""
    emb_table, conv_params, wfc, bfc = params
    x = x_tokens.T
    emb = jnp.take(emb_table, x, axis=0)                 # (B, S, E)
    B, S, E = emb.shape
    feats = []
    for (w, b), fs in zip(conv_params, filter_sizes):
        L = S - fs + 1
        conv = jnp.zeros((B, L, w.shape[-1]), jnp.float32)
        for k in range(fs):
            conv += jnp.einsum('ble,ef->blf', emb[:, k:k + L, :], w[k])
        conv = jnp.maximum(conv + b[None, :, :], 0.0)
        feats.append(jnp.max(conv, axis=1))
    cat = jnp.concatenate(feats, axis=-1)
    return cat @ wfc + bfc


if __name__ == "__main__":
    vocab_size = 64
    embedding_dim = 32
    n_filters = 16
    filter_sizes = (3, 4, 5)
    output_dim = 8
    seq_len, batch = 16, 16

    keys = jax.random.split(jax.random.PRNGKey(0), 10)

    emb_table = 0.1 * jax.random.normal(keys[0], (vocab_size, embedding_dim), jnp.float32)
    conv_params = []
    for i, fs in enumerate(filter_sizes):
        w = 0.1 * jax.random.normal(keys[1 + 2 * i], (fs, embedding_dim, n_filters), jnp.float32)
        b = 0.1 * jax.random.normal(keys[2 + 2 * i], (1, n_filters), jnp.float32)
        conv_params.append((w, b))
    wfc = 0.1 * jax.random.normal(keys[7], (len(filter_sizes) * n_filters, output_dim), jnp.float32)
    bfc = 0.1 * jax.random.normal(keys[8], (1, output_dim), jnp.float32)
    params = (emb_table, conv_params, wfc, bfc)

    # Module input: [seq_len, batch] int token ids (forward permutes to [batch, seq]).
    x = jax.random.randint(keys[9], (seq_len, batch), 0, vocab_size, dtype=jnp.int32)

    ref = cnn_reference(x, params, filter_sizes)

    # f32 MXU operands (default; safe on v5e).
    out = jax.block_until_ready(cnn_forward(x, params, filter_sizes))
    assert out.shape == (batch, output_dim), out.shape
    assert bool(jnp.allclose(out, ref, atol=1e-4, rtol=1e-4)), "f32 kernel mismatch vs reference"

    # bf16 MXU operands (v6e/v7x fast path); f32 accumulation + f32 epilogue.
    out_bf16 = jax.block_until_ready(
        cnn_forward(x, params, filter_sizes, compute_dtype=jnp.bfloat16))
    assert bool(jnp.allclose(out_bf16, ref, atol=5e-2, rtol=5e-2)), "bf16 kernel mismatch vs reference"

    print("KERNEL_OK")
</pallas_src>

<mosaic_0001>
module attributes {stable_mosaic.version = 11 : i64} {
  func.func @cnn_kernel(%arg0: i32, %arg1: memref<128x1xi32, #tpu.memory_space<vmem>>, %arg2: memref<64x32xf32, #tpu.memory_space<vmem>>, %arg3: memref<5x32x48xf32, #tpu.memory_space<vmem>>, %arg4: memref<1x48xf32, #tpu.memory_space<vmem>>, %arg5: memref<16x48xf32, #tpu.memory_space<vmem>>, %arg6: memref<48x8xf32, #tpu.memory_space<vmem>>, %arg7: memref<1x8xf32, #tpu.memory_space<vmem>>, %arg8: memref<8x8xf32, #tpu.memory_space<vmem>>) attributes {dimension_semantics = [#tpu.dimension_semantics<parallel>], iteration_bounds = array<i64: 2>, scalar_prefetch = 0 : i64, scratch_operands = 0 : i64, tpu.core_type = #tpu.core_type<tc>, window_params = [{transform_indices = @transform_0, window_bounds = array<i64: 128, 1>}, {pipeline_mode = #tpu.pipeline_mode<synchronous>, transform_indices = @transform_1, window_bounds = array<i64: 64, 32>}, {pipeline_mode = #tpu.pipeline_mode<synchronous>, transform_indices = @transform_2, window_bounds = array<i64: 5, 32, 48>}, {pipeline_mode = #tpu.pipeline_mode<synchronous>, transform_indices = @transform_3, window_bounds = array<i64: 1, 48>}, {pipeline_mode = #tpu.pipeline_mode<synchronous>, transform_indices = @transform_4, window_bounds = array<i64: 16, 48>}, {pipeline_mode = #tpu.pipeline_mode<synchronous>, transform_indices = @transform_5, window_bounds = array<i64: 48, 8>}, {pipeline_mode = #tpu.pipeline_mode<synchronous>, transform_indices = @transform_6, window_bounds = array<i64: 1, 8>}, {transform_indices = @transform_7, window_bounds = array<i64: 8, 8>}]} {
    %c0 = arith.constant 0 : index
    %c0_0 = arith.constant 0 : index
    %0 = vector.load %arg1[%c0, %c0_0] : memref<128x1xi32, #tpu.memory_space<vmem>>, vector<128x1xi32>
    %1 = tpu.iota {dimensions = array<i32: 1>} : vector<128x64xi32>
    %2 = vector.broadcast %0 : vector<128x1xi32> to vector<128x64xi32>
    %3 = arith.cmpi eq, %2, %1 : vector<128x64xi32>
    %4 = arith.extui %3 : vector<128x64xi1> to vector<128x64xi32>
    %5 = arith.sitofp %4 : vector<128x64xi32> to vector<128x64xf32>
    %c0_1 = arith.constant 0 : index
    %c0_2 = arith.constant 0 : index
    %6 = vector.load %arg2[%c0_1, %c0_2] : memref<64x32xf32, #tpu.memory_space<vmem>>, vector<64x32xf32>
    %cst = arith.constant dense<0.000000e+00> : vector<128x32xf32>
    %7 = tpu.matmul %5, %6, %cst {dimension_numbers = #tpu.dot_dimension_numbers<[1], [0], [0], [1], [0, 0, 1, 1], [], []>} : vector<128x64xf32>, vector<64x32xf32>, vector<128x32xf32> -> vector<128x32xf32>
    %cst_3 = arith.constant 0.000000e+00 : f32
    %8 = vector.broadcast %cst_3 : f32 to vector<128x48xf32>
    %c0_4 = arith.constant 0 : index
    %c0_5 = arith.constant 0 : index
    %c0_6 = arith.constant 0 : index
    %9 = vector.load %arg3[%c0_4, %c0_5, %c0_6] : memref<5x32x48xf32, #tpu.memory_space<vmem>>, vector<1x32x48xf32>
    %10 = vector.shape_cast %9 : vector<1x32x48xf32> to vector<32x48xf32>
    %cst_7 = arith.constant dense<0.000000e+00> : vector<128x48xf32>
    %11 = tpu.matmul %7, %10, %cst_7 {dimension_numbers = #tpu.dot_dimension_numbers<[1], [0], [0], [1], [0, 0, 1, 1], [], []>} : vector<128x32xf32>, vector<32x48xf32>, vector<128x48xf32> -> vector<128x48xf32>
    %12 = arith.addf %8, %11 : vector<128x48xf32>
    %13 = vector.extract_strided_slice %7 {offsets = [1, 0], sizes = [127, 32], strides = [1, 1]} : vector<128x32xf32> to vector<127x32xf32>
    %cst_8 = arith.constant 0.000000e+00 : f32
    %14 = vector.broadcast %cst_8 : f32 to vector<1x32xf32>
    %15 = tpu.concatenate %13, %14 in 0 : vector<127x32xf32>, vector<1x32xf32> -> vector<128x32xf32>
    %c1 = arith.constant 1 : index
    %c0_9 = arith.constant 0 : index
    %c0_10 = arith.constant 0 : index
    %16 = vector.load %arg3[%c1, %c0_9, %c0_10] : memref<5x32x48xf32, #tpu.memory_space<vmem>>, vector<1x32x48xf32>
    %17 = vector.shape_cast %16 : vector<1x32x48xf32> to vector<32x48xf32>
    %cst_11 = arith.constant dense<0.000000e+00> : vector<128x48xf32>
    %18 = tpu.matmul %15, %17, %cst_11 {dimension_numbers = #tpu.dot_dimension_numbers<[1], [0], [0], [1], [0, 0, 1, 1], [], []>} : vector<128x32xf32>, vector<32x48xf32>, vector<128x48xf32> -> vector<128x48xf32>
    %19 = arith.addf %12, %18 : vector<128x48xf32>
    %20 = vector.extract_strided_slice %7 {offsets = [2, 0], sizes = [126, 32], strides = [1, 1]} : vector<128x32xf32> to vector<126x32xf32>
    %cst_12 = arith.constant 0.000000e+00 : f32
    %21 = vector.broadcast %cst_12 : f32 to vector<2x32xf32>
    %22 = tpu.concatenate %20, %21 in 0 : vector<126x32xf32>, vector<2x32xf32> -> vector<128x32xf32>
    %c2 = arith.constant 2 : index
    %c0_13 = arith.constant 0 : index
    %c0_14 = arith.constant 0 : index
    %23 = vector.load %arg3[%c2, %c0_13, %c0_14] : memref<5x32x48xf32, #tpu.memory_space<vmem>>, vector<1x32x48xf32>
    %24 = vector.shape_cast %23 : vector<1x32x48xf32> to vector<32x48xf32>
    %cst_15 = arith.constant dense<0.000000e+00> : vector<128x48xf32>
    %25 = tpu.matmul %22, %24, %cst_15 {dimension_numbers = #tpu.dot_dimension_numbers<[1], [0], [0], [1], [0, 0, 1, 1], [], []>} : vector<128x32xf32>, vector<32x48xf32>, vector<128x48xf32> -> vector<128x48xf32>
    %26 = arith.addf %19, %25 : vector<128x48xf32>
    %27 = vector.extract_strided_slice %7 {offsets = [3, 0], sizes = [125, 32], strides = [1, 1]} : vector<128x32xf32> to vector<125x32xf32>
    %cst_16 = arith.constant 0.000000e+00 : f32
    %28 = vector.broadcast %cst_16 : f32 to vector<3x32xf32>
    %29 = tpu.concatenate %27, %28 in 0 : vector<125x32xf32>, vector<3x32xf32> -> vector<128x32xf32>
    %c3 = arith.constant 3 : index
    %c0_17 = arith.constant 0 : index
    %c0_18 = arith.constant 0 : index
    %30 = vector.load %arg3[%c3, %c0_17, %c0_18] : memref<5x32x48xf32, #tpu.memory_space<vmem>>, vector<1x32x48xf32>
    %31 = vector.shape_cast %30 : vector<1x32x48xf32> to vector<32x48xf32>
    %cst_19 = arith.constant dense<0.000000e+00> : vector<128x48xf32>
    %32 = tpu.matmul %29, %31, %cst_19 {dimension_numbers = #tpu.dot_dimension_numbers<[1], [0], [0], [1], [0, 0, 1, 1], [], []>} : vector<128x32xf32>, vector<32x48xf32>, vector<128x48xf32> -> vector<128x48xf32>
    %33 = arith.addf %26, %32 : vector<128x48xf32>
    %34 = vector.extract_strided_slice %7 {offsets = [4, 0], sizes = [124, 32], strides = [1, 1]} : vector<128x32xf32> to vector<124x32xf32>
    %cst_20 = arith.constant 0.000000e+00 : f32
    %35 = vector.broadcast %cst_20 : f32 to vector<4x32xf32>
    %36 = tpu.concatenate %34, %35 in 0 : vector<124x32xf32>, vector<4x32xf32> -> vector<128x32xf32>
    %c4 = arith.constant 4 : index
    %c0_21 = arith.constant 0 : index
    %c0_22 = arith.constant 0 : index
    %37 = vector.load %arg3[%c4, %c0_21, %c0_22] : memref<5x32x48xf32, #tpu.memory_space<vmem>>, vector<1x32x48xf32>
    %38 = vector.shape_cast %37 : vector<1x32x48xf32> to vector<32x48xf32>
    %cst_23 = arith.constant dense<0.000000e+00> : vector<128x48xf32>
    %39 = tpu.matmul %36, %38, %cst_23 {dimension_numbers = #tpu.dot_dimension_numbers<[1], [0], [0], [1], [0, 0, 1, 1], [], []>} : vector<128x32xf32>, vector<32x48xf32>, vector<128x48xf32> -> vector<128x48xf32>
    %40 = arith.addf %33, %39 : vector<128x48xf32>
    %c0_24 = arith.constant 0 : index
    %c0_25 = arith.constant 0 : index
    %41 = vector.load %arg4[%c0_24, %c0_25] : memref<1x48xf32, #tpu.memory_space<vmem>>, vector<1x48xf32>
    %42 = vector.broadcast %41 : vector<1x48xf32> to vector<128x48xf32>
    %43 = arith.addf %40, %42 : vector<128x48xf32>
    %cst_26 = arith.constant 0.000000e+00 : f32
    %44 = vector.broadcast %cst_26 : f32 to vector<128x48xf32>
    %45 = arith.maximumf %43, %44 : vector<128x48xf32>
    %46 = vector.shape_cast %45 : vector<128x48xf32> to vector<8x16x48xf32>
    %c0_27 = arith.constant 0 : index
    %c0_28 = arith.constant 0 : index
    %47 = vector.load %arg5[%c0_27, %c0_28] : memref<16x48xf32, #tpu.memory_space<vmem>>, vector<16x48xf32>
    %48 = vector.shape_cast %47 : vector<16x48xf32> to vector<1x16x48xf32>
    %49 = vector.broadcast %48 : vector<1x16x48xf32> to vector<8x16x48xf32>
    %50 = arith.addf %46, %49 : vector<8x16x48xf32>
    %cst_29 = arith.constant dense<0xFF800000> : vector<8x48xf32>
    %51 = vector.multi_reduction <maximumf>, %50, %cst_29 [1] : vector<8x16x48xf32> to vector<8x48xf32>
    %c0_30 = arith.constant 0 : index
    %c0_31 = arith.constant 0 : index
    %52 = vector.load %arg6[%c0_30, %c0_31] : memref<48x8xf32, #tpu.memory_space<vmem>>, vector<48x8xf32>
    %cst_32 = arith.constant dense<0.000000e+00> : vector<8x8xf32>
    %53 = tpu.matmul %51, %52, %cst_32 {dimension_numbers = #tpu.dot_dimension_numbers<[1], [0], [0], [1], [0, 0, 1, 1], [], []>} : vector<8x48xf32>, vector<48x8xf32>, vector<8x8xf32> -> vector<8x8xf32>
    %c0_33 = arith.constant 0 : index
    %c0_34 = arith.constant 0 : index
    %54 = vector.load %arg7[%c0_33, %c0_34] : memref<1x8xf32, #tpu.memory_space<vmem>>, vector<1x8xf32>
    %55 = vector.broadcast %54 : vector<1x8xf32> to vector<8x8xf32>
    %56 = arith.addf %53, %55 : vector<8x8xf32>
    %c0_35 = arith.constant 0 : index
    %c0_36 = arith.constant 0 : index
    %57 = vector.load %arg8[%c0_35, %c0_36] : memref<8x8xf32, #tpu.memory_space<vmem>>, vector<8x8xf32>
    tpu.vector_store %arg8[%c0_35, %c0_36], %56 {strides = array<i32>} : memref<8x8xf32, #tpu.memory_space<vmem>>, vector<8x8xf32>,
    return
  }
  func.func @transform_0(%arg0: i32) -> (i32, i32) {
    %c0_i32 = arith.constant 0 : i32
    %c0_i32_0 = arith.constant 0 : i32
    return %arg0, %c0_i32 : i32, i32
  }
  func.func @transform_1(%arg0: i32) -> (i32, i32) {
    %c0_i32 = arith.constant 0 : i32
    %c0_i32_0 = arith.constant 0 : i32
    %c0_i32_1 = arith.constant 0 : i32
    return %c0_i32, %c0_i32_0 : i32, i32
  }
  func.func @transform_2(%arg0: i32) -> (i32, i32, i32) {
    %c0_i32 = arith.constant 0 : i32
    %c0_i32_0 = arith.constant 0 : i32
    %c0_i32_1 = arith.constant 0 : i32
    %c0_i32_2 = arith.constant 0 : i32
    return %c0_i32, %c0_i32_0, %c0_i32_1 : i32, i32, i32
  }
  func.func @transform_3(%arg0: i32) -> (i32, i32) {
    %c0_i32 = arith.constant 0 : i32
    %c0_i32_0 = arith.constant 0 : i32
    %c0_i32_1 = arith.constant 0 : i32
    return %c0_i32, %c0_i32_0 : i32, i32
  }
  func.func @transform_4(%arg0: i32) -> (i32, i32) {
    %c0_i32 = arith.constant 0 : i32
    %c0_i32_0 = arith.constant 0 : i32
    %c0_i32_1 = arith.constant 0 : i32
    return %c0_i32, %c0_i32_0 : i32, i32
  }
  func.func @transform_5(%arg0: i32) -> (i32, i32) {
    %c0_i32 = arith.constant 0 : i32
    %c0_i32_0 = arith.constant 0 : i32
    %c0_i32_1 = arith.constant 0 : i32
    return %c0_i32, %c0_i32_0 : i32, i32
  }
  func.func @transform_6(%arg0: i32) -> (i32, i32) {
    %c0_i32 = arith.constant 0 : i32
    %c0_i32_0 = arith.constant 0 : i32
    %c0_i32_1 = arith.constant 0 : i32
    return %c0_i32, %c0_i32_0 : i32, i32
  }
  func.func @transform_7(%arg0: i32) -> (i32, i32) {
    %c0_i32 = arith.constant 0 : i32
    %c0_i32_0 = arith.constant 0 : i32
    return %arg0, %c0_i32 : i32, i32
  }
}

</mosaic_0001>

<llo_original>
// kernel: tpu_custom_call.1
$region0: #{tpu_custom_call.1}
  #allocation0 [shape = 'u32[]', space=smem, size = 0x4, offset = 0x4, fixed_abs, tag = 'smem constant byte address 0x4 - core index']
  #allocation1 [shape = 'u32[144,128]{1,0:T(1,128)}', space=vmem, size = 0x12000, scoped, tag = 'internal scratch']
  %s0 = inlined_call_operand.vmem [shape: s32[256,1], index: 0, kind: input, shape index: {}]
  %s1 = inlined_call_operand.vmem [shape: f32[64,32], index: 1, kind: input, shape index: {}]
  %s2 = inlined_call_operand.vmem [shape: f32[5,32,48], index: 2, kind: input, shape index: {}]
  %s3 = inlined_call_operand.vmem [shape: f32[1,48], index: 3, kind: input, shape index: {}]
  %s4 = inlined_call_operand.vmem [shape: f32[16,48], index: 4, kind: input, shape index: {}]
  %s5 = inlined_call_operand.vmem [shape: f32[48,8], index: 5, kind: input, shape index: {}]
  %s6 = inlined_call_operand.vmem [shape: f32[1,8], index: 6, kind: input, shape index: {}]
  %s7 = inlined_call_operand.vmem [shape: f32[16,8], index: 7, kind: output, shape index: {}]
  %s8 = sld [smem:[#allocation0]]
  $region61: #{tpu_custom_call.1} parent=0
    _
  %s10 = ssub.s32 1, %s8
  %s11 = scalar_select 0, %s10, %s8
  loop: start=0, step=1, limit=4
  $region2: #{tpu_custom_call.1} parent=0 // loop_pre_header
    _
  $region3: #{tpu_custom_call.1} parent=0 // loop_header
    %s13 = sphi 0, %s17
    %p14 = scmp.ge.s32.totalorder %s13, 4
    %s23 = sphi 0, %s25
    %s26 = sphi 0, %s23
    %s27 = sphi 0, %s26
    %s43 = sphi 0, %s27
    %s47 = sphi 0, %s47
    %s49 = sphi 0, %s47
    %s50 = sphi 0, %s49
    %s64 = sphi 0, %s50
    %s68 = sphi 0, %s68
    %s70 = sphi 0, %s68
    %s71 = sphi 0, %s70
    %s85 = sphi 0, %s71
    %s89 = sphi 0, %s89
    %s91 = sphi 0, %s89
    %s92 = sphi 0, %s91
    %s106 = sphi 0, %s92
    %s110 = sphi 0, %s110
    %s112 = sphi 0, %s110
    %s113 = sphi 0, %s112
    %s127 = sphi 0, %s113
    %s131 = sphi 0, %s131
    %s133 = sphi 0, %s131
    %s134 = sphi 0, %s133
    %s148 = sphi 0, %s134
    %s152 = sphi 0, %s152
    %s154 = sphi 0, %s152
    %s155 = sphi 0, %s154
    %s169 = sphi 0, %s155
    %s175 = sphi 0, %s177
    %s178 = sphi 0, %s175
    %s179 = sphi 0, %s178
    %s195 = sphi 0, %s179
  $region4: #{tpu_custom_call.1} parent=0 // loop_header_branch
    %16 = sbr.rel (%p14) target = $region8
  $region5: #{tpu_custom_call.1} parent=0 // loop_body
    %s18 = ssub.s32 %s13, 1
    %s19 = ssub.s32 %s13, 2
    %s20 = sadd.s32 %s13, 1
    %s21 = ssub.s32 %s13, %s20
    %p22 = scmp.eq.s32.totalorder %s21, 0
    %s24 = sadd.s32 %s23, 1
    %s25 = scalar_select %p22, %s23, %s24
    %p28 = pneg %p22
    %p29 = scmp.eq.s32.totalorder %s13, 1
    %p30 = por %p28, %p29
    %p31 = scmp.ne.s32.totalorder %s23, %s26
    %p32 = scmp.eq.s32.totalorder %s13, 0
    %p33 = por %p31, %p32
    %p34 = scmp.ne.s32.totalorder %s23, %s26
    %p35 = scmp.eq.s32.totalorder %s18, 1
    %p36 = por %p34, %p35
    %p37 = scmp.ne.s32.totalorder %s26, %s27
    %p38 = scmp.eq.s32.totalorder %s18, 0
    %p39 = por %p37, %p38
    %p40 = scmp.ne.s32.totalorder %s26, %s27
    %p41 = scmp.eq.s32.totalorder %s19, 1
    %p42 = por %p40, %p41
    %p44 = scmp.ne.s32.totalorder %s27, %s43
    %p45 = scmp.eq.s32.totalorder %s19, 0
    %p46 = por %p44, %p45
    %s48 = sadd.s32 %s47, 1
    %p51 = scmp.eq.s32.totalorder %s13, 1
    %p52 = scmp.ne.s32.totalorder %s47, %s49
    %p53 = scmp.eq.s32.totalorder %s13, 0
    %p54 = por %p52, %p53
    %p55 = scmp.ne.s32.totalorder %s47, %s49
    %p56 = scmp.eq.s32.totalorder %s18, 1
    %p57 = por %p55, %p56
    %p58 = scmp.ne.s32.totalorder %s49, %s50
    %p59 = scmp.eq.s32.totalorder %s18, 0
    %p60 = por %p58, %p59
    %p61 = scmp.ne.s32.totalorder %s49, %s50
    %p62 = scmp.eq.s32.totalorder %s19, 1
    %p63 = por %p61, %p62
    %p65 = scmp.ne.s32.totalorder %s50, %s64
    %p66 = scmp.eq.s32.totalorder %s19, 0
    %p67 = por %p65, %p66
    %s69 = sadd.s32 %s68, 1
    %p72 = scmp.eq.s32.totalorder %s13, 1
    %p73 = scmp.ne.s32.totalorder %s68, %s70
    %p74 = scmp.eq.s32.totalorder %s13, 0
    %p75 = por %p73, %p74
    %p76 = scmp.ne.s32.totalorder %s68, %s70
    %p77 = scmp.eq.s32.totalorder %s18, 1
    %p78 = por %p76, %p77
    %p79 = scmp.ne.s32.totalorder %s70, %s71
    %p80 = scmp.eq.s32.totalorder %s18, 0
    %p81 = por %p79, %p80
    %p82 = scmp.ne.s32.totalorder %s70, %s71
    %p83 = scmp.eq.s32.totalorder %s19, 1
    %p84 = por %p82, %p83
    %p86 = scmp.ne.s32.totalorder %s71, %s85
    %p87 = scmp.eq.s32.totalorder %s19, 0
    %p88 = por %p86, %p87
    %s90 = sadd.s32 %s89, 1
    %p93 = scmp.eq.s32.totalorder %s13, 1
    %p94 = scmp.ne.s32.totalorder %s89, %s91
    %p95 = scmp.eq.s32.totalorder %s13, 0
    %p96 = por %p94, %p95
    %p97 = scmp.ne.s32.totalorder %s89, %s91
    %p98 = scmp.eq.s32.totalorder %s18, 1
    %p99 = por %p97, %p98
    %p100 = scmp.ne.s32.totalorder %s91, %s92
    %p101 = scmp.eq.s32.totalorder %s18, 0
    %p102 = por %p100, %p101
    %p103 = scmp.ne.s32.totalorder %s91, %s92
    %p104 = scmp.eq.s32.totalorder %s19, 1
    %p105 = por %p103, %p104
    %p107 = scmp.ne.s32.totalorder %s92, %s106
    %p108 = scmp.eq.s32.totalorder %s19, 0
    %p109 = por %p107, %p108
    %s111 = sadd.s32 %s110, 1
    %p114 = scmp.eq.s32.totalorder %s13, 1
    %p115 = scmp.ne.s32.totalorder %s110, %s112
    %p116 = scmp.eq.s32.totalorder %s13, 0
    %p117 = por %p115, %p116
    %p118 = scmp.ne.s32.totalorder %s110, %s112
    %p119 = scmp.eq.s32.totalorder %s18, 1
    %p120 = por %p118, %p119
    %p121 = scmp.ne.s32.totalorder %s112, %s113
    %p122 = scmp.eq.s32.totalorder %s18, 0
    %p123 = por %p121, %p122
    %p124 = scmp.ne.s32.totalorder %s112, %s113
    %p125 = scmp.eq.s32.totalorder %s19, 1
    %p126 = por %p124, %p125
    %p128 = scmp.ne.s32.totalorder %s113, %s127
    %p129 = scmp.eq.s32.totalorder %s19, 0
    %p130 = por %p128, %p129
    %s132 = sadd.s32 %s131, 1
    %p135 = scmp.eq.s32.totalorder %s13, 1
    %p136 = scmp.ne.s32.totalorder %s131, %s133
    %p137 = scmp.eq.s32.totalorder %s13, 0
    %p138 = por %p136, %p137
    %p139 = scmp.ne.s32.totalorder %s131, %s133
    %p140 = scmp.eq.s32.totalorder %s18, 1
    %p141 = por %p139, %p140
    %p142 = scmp.ne.s32.totalorder %s133, %s134
    %p143 = scmp.eq.s32.totalorder %s18, 0
    %p144 = por %p142, %p143
    %p145 = scmp.ne.s32.totalorder %s133, %s134
    %p146 = scmp.eq.s32.totalorder %s19, 1
    %p147 = por %p145, %p146
    %p149 = scmp.ne.s32.totalorder %s134, %s148
    %p150 = scmp.eq.s32.totalorder %s19, 0
    %p151 = por %p149, %p150
    %s153 = sadd.s32 %s152, 1
    %p156 = scmp.eq.s32.totalorder %s13, 1
    %p157 = scmp.ne.s32.totalorder %s152, %s154
    %p158 = scmp.eq.s32.totalorder %s13, 0
    %p159 = por %p157, %p158
    %p160 = scmp.ne.s32.totalorder %s152, %s154
    %p161 = scmp.eq.s32.totalorder %s18, 1
    %p162 = por %p160, %p161
    %p163 = scmp.ne.s32.totalorder %s154, %s155
    %p164 = scmp.eq.s32.totalorder %s18, 0
    %p165 = por %p163, %p164
    %p166 = scmp.ne.s32.totalorder %s154, %s155
    %p167 = scmp.eq.s32.totalorder %s19, 1
    %p168 = por %p166, %p167
    %p170 = scmp.ne.s32.totalorder %s155, %s169
    %p171 = scmp.eq.s32.totalorder %s19, 0
    %p172 = por %p170, %p171
    %s173 = ssub.s32 %s13, %s20
    %p174 = scmp.eq.s32.totalorder %s173, 0
    %s176 = sadd.s32 %s175, 1
    %s177 = scalar_select %p174, %s175, %s176
    %p180 = pneg %p174
    %p181 = scmp.eq.s32.totalorder %s13, 1
    %p182 = por %p180, %p181
    %p183 = scmp.ne.s32.totalorder %s175, %s178
    %p184 = scmp.eq.s32.totalorder %s13, 0
    %p185 = por %p183, %p184
    %p186 = scmp.ne.s32.totalorder %s175, %s178
    %p187 = scmp.eq.s32.totalorder %s18, 1
    %p188 = por %p186, %p187
    %p189 = scmp.ne.s32.totalorder %s178, %s179
    %p190 = scmp.eq.s32.totalorder %s18, 0
    %p191 = por %p189, %p190
    %p192 = scmp.ne.s32.totalorder %s178, %s179
    %p193 = scmp.eq.s32.totalorder %s19, 1
    %p194 = por %p192, %p193
    %p196 = scmp.ne.s32.totalorder %s179, %s195
    %p197 = scmp.eq.s32.totalorder %s19, 0
    %p198 = por %p196, %p197
    %p199 = scmp.le.s32.totalorder 1, %s13
    %p200 = scmp.lt.s32.totalorder %s13, 3
    %p201 = pnand %p199, %p200
    %p202 = pneg %p201
    // Predicated region
    $region9: #{tpu_custom_call.1} parent=5 // pred_check
      _
    $region10: #{tpu_custom_call.1} parent=5 // pred_check_branch
      %204 = sbr.rel (%p201) target = $region12
    $region11: #{tpu_custom_call.1} parent=5 // pred_region
      %s205 = ssub.s32 %s13, 1
      // Predicated region
      $region13: #{tpu_custom_call.1} parent=11 // pred_check
        %p206 = pneg %p60
      $region14: #{tpu_custom_call.1} parent=11 // pred_check_branch
        %208 = sbr.rel (%p206) target = $region16
      $region15: #{tpu_custom_call.1} parent=11 // pred_region
        _
      $region16: #{tpu_custom_call.1} parent=11 // pred_fallthru
        _
      // Predicated region
      $region17: #{tpu_custom_call.1} parent=11 // pred_check
        %p209 = pneg %p81
      $region18: #{tpu_custom_call.1} parent=11 // pred_check_branch
        %211 = sbr.rel (%p209) target = $region20
      $region19: #{tpu_custom_call.1} parent=11 // pred_region
        _
      $region20: #{tpu_custom_call.1} parent=11 // pred_fallthru
        _
      // Predicated region
      $region21: #{tpu_custom_call.1} parent=11 // pred_check
        %p212 = pneg %p102
      $region22: #{tpu_custom_call.1} parent=11 // pred_check_branch
        %214 = sbr.rel (%p212) target = $region24
      $region23: #{tpu_custom_call.1} parent=11 // pred_region
        _
      $region24: #{tpu_custom_call.1} parent=11 // pred_fallthru
        _
      // Predicated region
      $region25: #{tpu_custom_call.1} parent=11 // pred_check
        %p215 = pneg %p123
      $region26: #{tpu_custom_call.1} parent=11 // pred_check_branch
        %217 = sbr.rel (%p215) target = $region28
      $region27: #{tpu_custom_call.1} parent=11 // pred_region
        _
      $region28: #{tpu_custom_call.1} parent=11 // pred_fallthru
        _
      // Predicated region
      $region29: #{tpu_custom_call.1} parent=11 // pred_check
        %p218 = pneg %p144
      $region30: #{tpu_custom_call.1} parent=11 // pred_check_branch
        %220 = sbr.rel (%p218) target = $region32
      $region31: #{tpu_custom_call.1} parent=11 // pred_region
        _
      $region32: #{tpu_custom_call.1} parent=11 // pred_fallthru
        _
      // Predicated region
      $region33: #{tpu_custom_call.1} parent=11 // pred_check
        %p221 = pneg %p165
      $region34: #{tpu_custom_call.1} parent=11 // pred_check_branch
        %223 = sbr.rel (%p221) target = $region36
      $region35: #{tpu_custom_call.1} parent=11 // pred_region
        _
      $region36: #{tpu_custom_call.1} parent=11 // pred_fallthru
        _
    $region12: #{tpu_custom_call.1} parent=5 // pred_fallthru
      _
    %p224 = scmp.lt.s32.totalorder %s13, 2
    // Predicated region
    $region37: #{tpu_custom_call.1} parent=5 // pred_check
      %p225 = pneg %p224
    $region38: #{tpu_custom_call.1} parent=5 // pred_check_branch
      %227 = sbr.rel (%p225) target = $region40
    $region39: #{tpu_custom_call.1} parent=5 // pred_region
      // Predicated region
      $region41: #{tpu_custom_call.1} parent=39 // pred_check
        %p228 = pneg %p33
      $region42: #{tpu_custom_call.1} parent=39 // pred_check_branch
        %230 = sbr.rel (%p228) target = $region44
      $region43: #{tpu_custom_call.1} parent=39 // pred_region
        %s231 = smul.u32 16, %s13
        %p232 = scmp.lt.s32.totalorder %s231, 31
        %s233 = scalar_select %p232, %s231, 31
        %s234 = smul.addr %s233, 8
        %s235 = scalar_lea.vmem %s0, %s234
        %s236 = smul.u32 16, %s13
      $region44: #{tpu_custom_call.1} parent=39 // pred_fallthru
        _
    $region40: #{tpu_custom_call.1} parent=5 // pred_fallthru
      _
    %p237 = scmp.le.s32.totalorder 1, %s13
    %p238 = scmp.lt.s32.totalorder %s13, 3
    %p239 = pnand %p237, %p238
    %p240 = pneg %p239
    // Predicated region
    $region45: #{tpu_custom_call.1} parent=5 // pred_check
      _
    $region46: #{tpu_custom_call.1} parent=5 // pred_check_branch
      %242 = sbr.rel (%p239) target = $region48
    $region47: #{tpu_custom_call.1} parent=5 // pred_region
      %s243 = ssub.s32 %s13, 1
      %s244 = smul.u32 16, %s18
      %p245 = scmp.lt.s32.totalorder %s244, 31
      %s246 = scalar_select %p245, %s244, 31
      %s247 = smul.addr %s246, 8
      %s248 = scalar_lea.vmem %s0, %s247
      %p249 = pneg %p39
      %p250 = pneg %p36
      %p251 = pneg %p60
      %p252 = pneg %p57
      %p253 = pneg %p81
      %p254 = pneg %p78
      %p255 = pneg %p102
      %p256 = pneg %p99
      %p257 = pneg %p123
      %p258 = pneg %p120
      %p259 = pneg %p144
      %p260 = pneg %p141
      %p261 = pneg %p165
      %p262 = pneg %p162
      %p263 = pneg %p191
      %p264 = pneg %p188
      %p265 = scmp.lt.s32.totalorder %s18, 1
      %s266 = scalar_select %p265, %s18, 1
      %s267 = smul.addr %s266, 8
      %s268 = scalar_lea.vmem %s7, %s267
      %s269 = smul.u32 16, %s18
      %p270 = scmp.lt.s32.totalorder %s269, 31
      %s271 = scalar_select %p270, %s269, 31
      %s272 = smul.addr %s271, 8
      %s273 = scalar_lea.vmem %s0, %s272
      %s274 = smul.u32 16, %s18
      %p275 = scmp.lt.s32.totalorder %s18, 1
      %s276 = scalar_select %p275, %s18, 1
      %s277 = smul.addr %s276, 8
      %s278 = scalar_lea.vmem %s7, %s277
      %v279 = vld [vmem:[%s273] sm:$0xff]
      %v280 = vld [vmem:[%s273 + $0x8] sm:$0xff]
      %v281 = vld [vmem:[%s273 + $0x10] sm:$0xff]
      %v282 = vld [vmem:[%s273 + $0x18] sm:$0xff]
      %v283 = vld [vmem:[%s273 + $0x20] sm:$0xff]
      %v284 = vld [vmem:[%s273 + $0x28] sm:$0xff]
      %v285 = vld [vmem:[%s273 + $0x30] sm:$0xff]
      %v286 = vld [vmem:[%s273 + $0x38] sm:$0xff]
      %v287 = vld [vmem:[%s273 + $0x40] sm:$0xff]
      %v288 = vld [vmem:[%s273 + $0x48] sm:$0xff]
      %v289 = vld [vmem:[%s273 + $0x50] sm:$0xff]
      %v290 = vld [vmem:[%s273 + $0x58] sm:$0xff]
      %v291 = vld [vmem:[%s273 + $0x60] sm:$0xff]
      %v292 = vld [vmem:[%s273 + $0x68] sm:$0xff]
      %v293 = vld [vmem:[%s273 + $0x70] sm:$0xff]
      %v294 = vld [vmem:[%s273 + $0x78] sm:$0xff]
      %v295 = vlaneseq
      %v296 = vand.u32 %v295, 127
      %297 = vset.pattern.permute.xlu0 0
      %298 = vperm.xlu0 %297, %v279
      %v299 = vpop.permute.xlu0 %298
      %300 = vset.pattern.permute.xlu0 0
      %301 = vperm.xlu0 %300, %v280
      %v302 = vpop.permute.xlu0 %301
      %303 = vset.pattern.permute.xlu0 0
      %304 = vperm.xlu0 %303, %v281
      %v305 = vpop.permute.xlu0 %304
      %306 = vset.pattern.permute.xlu0 0
      %307 = vperm.xlu0 %306, %v282
      %v308 = vpop.permute.xlu0 %307
      %309 = vset.pattern.permute.xlu0 0
      %310 = vperm.xlu0 %309, %v283
      %v311 = vpop.permute.xlu0 %310
      %312 = vset.pattern.permute.xlu0 0
      %313 = vperm.xlu0 %312, %v284
      %v314 = vpop.permute.xlu0 %313
      %315 = vset.pattern.permute.xlu0 0
      %316 = vperm.xlu0 %315, %v285
      %v317 = vpop.permute.xlu0 %316
      %318 = vset.pattern.permute.xlu0 0
      %319 = vperm.xlu0 %318, %v286
      %v320 = vpop.permute.xlu0 %319
      %321 = vset.pattern.permute.xlu0 0
      %322 = vperm.xlu0 %321, %v287
      %v323 = vpop.permute.xlu0 %322
      %324 = vset.pattern.permute.xlu0 0
      %325 = vperm.xlu0 %324, %v288
      %v326 = vpop.permute.xlu0 %325
      %327 = vset.pattern.permute.xlu0 0
      %328 = vperm.xlu0 %327, %v289
      %v329 = vpop.permute.xlu0 %328
      %330 = vset.pattern.permute.xlu0 0
      %331 = vperm.xlu0 %330, %v290
      %v332 = vpop.permute.xlu0 %331
      %333 = vset.pattern.permute.xlu0 0
      %334 = vperm.xlu0 %333, %v291
      %v335 = vpop.permute.xlu0 %334
      %336 = vset.pattern.permute.xlu0 0
      %337 = vperm.xlu0 %336, %v292
      %v338 = vpop.permute.xlu0 %337
      %339 = vset.pattern.permute.xlu0 0
      %340 = vperm.xlu0 %339, %v293
      %v341 = vpop.permute.xlu0 %340
      %342 = vset.pattern.permute.xlu0 0
      %343 = vperm.xlu0 %342, %v294
      %v344 = vpop.permute.xlu0 %343
      %vm345 = vcmp.eq.s32.totalorder %v299, %v296
      %vm346 = vcmp.eq.s32.totalorder %v302, %v296
      %vm347 = vcmp.eq.s32.totalorder %v305, %v296
      %vm348 = vcmp.eq.s32.totalorder %v308, %v296
      %vm349 = vcmp.eq.s32.totalorder %v311, %v296
      %vm350 = vcmp.eq.s32.totalorder %v314, %v296
      %vm351 = vcmp.eq.s32.totalorder %v317, %v296
      %vm352 = vcmp.eq.s32.totalorder %v320, %v296
      %vm353 = vcmp.eq.s32.totalorder %v323, %v296
      %vm354 = vcmp.eq.s32.totalorder %v326, %v296
      %vm355 = vcmp.eq.s32.totalorder %v329, %v296
      %vm356 = vcmp.eq.s32.totalorder %v332, %v296
      %vm357 = vcmp.eq.s32.totalorder %v335, %v296
      %vm358 = vcmp.eq.s32.totalorder %v338, %v296
      %vm359 = vcmp.eq.s32.totalorder %v341, %v296
      %vm360 = vcmp.eq.s32.totalorder %v344, %v296
      %v361 = vsel %vm345, 1, 0
      %v362 = vsel %vm346, 1, 0
      %v363 = vsel %vm347, 1, 0
      %v364 = vsel %vm348, 1, 0
      %v365 = vsel %vm349, 1, 0
      %v366 = vsel %vm350, 1, 0
      %v367 = vsel %vm351, 1, 0
      %v368 = vsel %vm352, 1, 0
      %v369 = vsel %vm353, 1, 0
      %v370 = vsel %vm354, 1, 0
      %v371 = vsel %vm355, 1, 0
      %v372 = vsel %vm356, 1, 0
      %v373 = vsel %vm357, 1, 0
      %v374 = vsel %vm358, 1, 0
      %v375 = vsel %vm359, 1, 0
      %v376 = vsel %vm360, 1, 0
      %v377 = vcvt.s32.f32 %v361
      %v378 = vcvt.s32.f32 %v362
      %v379 = vcvt.s32.f32 %v363
      %v380 = vcvt.s32.f32 %v364
      %v381 = vcvt.s32.f32 %v365
      %v382 = vcvt.s32.f32 %v366
      %v383 = vcvt.s32.f32 %v367
      %v384 = vcvt.s32.f32 %v368
      %v385 = vcvt.s32.f32 %v369
      %v386 = vcvt.s32.f32 %v370
      %v387 = vcvt.s32.f32 %v371
      %v388 = vcvt.s32.f32 %v372
      %v389 = vcvt.s32.f32 %v373
      %v390 = vcvt.s32.f32 %v374
      %v391 = vcvt.s32.f32 %v375
      %v392 = vcvt.s32.f32 %v376
      %v393 = vld [vmem:[%s1] sm:$0xff]
      %v394 = vld [vmem:[%s1 + $0x8] sm:$0xff]
      %v395 = vld [vmem:[%s1 + $0x10] sm:$0xff]
      %v396 = vld [vmem:[%s1 + $0x18] sm:$0xff]
      %v397 = vld [vmem:[%s1 + $0x20] sm:$0xff]
      %v398 = vld [vmem:[%s1 + $0x28] sm:$0xff]
      %v399 = vld [vmem:[%s1 + $0x30] sm:$0xff]
      %v400 = vld [vmem:[%s1 + $0x38] sm:$0xff]
      %vm401 = vcmask 523264
      %v403 = vsel %vm401, %v377, 0
      %v406 = vsel %vm401, %v378, 0
      %v409 = vsel %vm401, %v379, 0
      %v412 = vsel %vm401, %v380, 0
      %v415 = vsel %vm401, %v381, 0
      %v418 = vsel %vm401, %v382, 0
      %v421 = vsel %vm401, %v383, 0
      %v424 = vsel %vm401, %v384, 0
      %v427 = vsel %vm401, %v385, 0
      %v430 = vsel %vm401, %v386, 0
      %v433 = vsel %vm401, %v387, 0
      %v436 = vsel %vm401, %v388, 0
      %v439 = vsel %vm401, %v389, 0
      %v442 = vsel %vm401, %v390, 0
      %v445 = vsel %vm401, %v391, 0
      %v448 = vsel %vm401, %v392, 0
      %450 = vmatprep.subr.mxu0 0.0
      %451 = vmatpush1.msra.mxu0 0.0
      %452 = vmatprep.subr.mxu0 0.0
      %453 = vmatpush1.msra.mxu0 0.0
      %454 = vmatprep.subr.mxu0 0.0
      %455 = vmatpush1.msra.mxu0 0.0
      %456 = vmatprep.subr.mxu0 0.0
      %457 = vmatpush1.msra.mxu0 0.0
      %458 = vmatprep.subr.mxu0 0.0
      %459 = vmatpush1.msra.mxu0 0.0
      %460 = vmatprep.subr.mxu0 0.0
      %461 = vmatpush1.msra.mxu0 0.0
      %462 = vmatprep.subr.mxu0 0.0
      %463 = vmatpush1.msra.mxu0 0.0
      %464 = vmatprep.subr.mxu0 0.0
      %465 = vmatpush1.msra.mxu0 0.0
      %466 = vmatprep.subr.mxu0 0.0
      %467 = vmatpush1.msra.mxu0 %v400
      %468 = vmatprep.subr.mxu0 0.0
      %469 = vmatpush1.msra.mxu0 %v399
      %470 = vmatprep.subr.mxu0 0.0
      %471 = vmatpush1.msra.mxu0 %v398
      %472 = vmatprep.subr.mxu0 0.0
      %473 = vmatpush1.msra.mxu0 %v397
      %474 = vmatprep.subr.mxu0 0.0
      %475 = vmatpush1.msra.mxu0 %v396
      %476 = vmatprep.subr.mxu0 0.0
      %477 = vmatpush1.msra.mxu0 %v395
      %478 = vmatprep.subr.mxu0 0.0
      %479 = vmatpush1.msra.mxu0 %v394
      %480 = vmatprep.subr.mxu0 0.0
      %481 = vmatpush1.msra.mxu0 %v393
      %482 = vmatprep.subr.mxu0 0.0
      %483 = vmatpush2.msra.mxu0 0.0
      %484 = vmatprep.subr.mxu0 0.0
      %485 = vmatpush2.msra.mxu0 0.0
      %486 = vmatprep.subr.mxu0 0.0
      %487 = vmatpush2.msra.mxu0 0.0
      %488 = vmatprep.subr.mxu0 0.0
      %489 = vmatpush2.msra.mxu0 0.0
      %490 = vmatprep.subr.mxu0 0.0
      %491 = vmatpush2.msra.mxu0 0.0
      %492 = vmatprep.subr.mxu0 0.0
      %493 = vmatpush2.msra.mxu0 0.0
      %494 = vmatprep.subr.mxu0 0.0
      %495 = vmatpush2.msra.mxu0 0.0
      %496 = vmatprep.subr.mxu0 0.0
      %497 = vmatpush2.msra.mxu0 0.0
      %498 = vmatprep.subr.mxu0 0.0
      %499 = vmatpush2.msra.mxu0 0.0
      %500 = vmatprep.subr.mxu0 0.0
      %501 = vmatpush2.msra.mxu0 0.0
      %502 = vmatprep.subr.mxu0 0.0
      %503 = vmatpush2.msra.mxu0 0.0
      %504 = vmatprep.subr.mxu0 0.0
      %505 = vmatpush2.msra.mxu0 0.0
      %506 = vmatprep.subr.mxu0 0.0
      %507 = vmatpush2.msra.mxu0 0.0
      %508 = vmatprep.subr.mxu0 0.0
      %509 = vmatpush2.msra.mxu0 0.0
      %510 = vmatprep.subr.mxu0 0.0
      %511 = vmatpush2.msra.mxu0 0.0
      %512 = vmatprep.subr.mxu0 0.0
      %513 = vmatpush2.msra.mxu0 0.0
      %514 = vmatprep.mubr.f32.mxu0 0.0
      %515 = vmatmul.mubr.f32.gmra.mxu0 %v403
      %v516 = vpop.f32.mrf.mxu0
      %v517 = vadd.f32 0.0, %v516
      %v518 = vpop.f32.mrf.mxu0
      %519 = vmatprep.mubr.f32.mxu0 0.0
      %520 = vmatmul.mubr.f32.gmra.mxu0 %v406
      %v521 = vpop.f32.mrf.mxu0
      %v522 = vadd.f32 0.0, %v521
      %v523 = vpop.f32.mrf.mxu0
      %524 = vmatprep.mubr.f32.mxu0 0.0
      %525 = vmatmul.mubr.f32.gmra.mxu0 %v409
      %v526 = vpop.f32.mrf.mxu0
      %v527 = vadd.f32 0.0, %v526
      %v528 = vpop.f32.mrf.mxu0
      %529 = vmatprep.mubr.f32.mxu0 0.0
      %530 = vmatmul.mubr.f32.gmra.mxu0 %v412
      %v531 = vpop.f32.mrf.mxu0
      %v532 = vadd.f32 0.0, %v531
      %v533 = vpop.f32.mrf.mxu0
      %534 = vmatprep.mubr.f32.mxu0 0.0
      %535 = vmatmul.mubr.f32.gmra.mxu0 %v415
      %v536 = vpop.f32.mrf.mxu0
      %v537 = vadd.f32 0.0, %v536
      %v538 = vpop.f32.mrf.mxu0
      %539 = vmatprep.mubr.f32.mxu0 0.0
      %540 = vmatmul.mubr.f32.gmra.mxu0 %v418
      %v541 = vpop.f32.mrf.mxu0
      %v542 = vadd.f32 0.0, %v541
      %v543 = vpop.f32.mrf.mxu0
      %544 = vmatprep.mubr.f32.mxu0 0.0
      %545 = vmatmul.mubr.f32.gmra.mxu0 %v421
      %v546 = vpop.f32.mrf.mxu0
      %v547 = vadd.f32 0.0, %v546
      %v548 = vpop.f32.mrf.mxu0
      %549 = vmatprep.mubr.f32.mxu0 0.0
      %550 = vmatmul.mubr.f32.gmra.mxu0 %v424
      %v551 = vpop.f32.mrf.mxu0
      %v552 = vadd.f32 0.0, %v551
      %v553 = vpop.f32.mrf.mxu0
      %554 = vmatprep.mubr.f32.mxu0 0.0
      %555 = vmatmul.mubr.f32.gmra.mxu0 %v427
      %v556 = vpop.f32.mrf.mxu0
      %v557 = vadd.f32 0.0, %v556
      %v558 = vpop.f32.mrf.mxu0
      %559 = vmatprep.mubr.f32.mxu0 0.0
      %560 = vmatmul.mubr.f32.gmra.mxu0 %v430
      %v561 = vpop.f32.mrf.mxu0
      %v562 = vadd.f32 0.0, %v561
      %v563 = vpop.f32.mrf.mxu0
      %564 = vmatprep.mubr.f32.mxu0 0.0
      %565 = vmatmul.mubr.f32.gmra.mxu0 %v433
      %v566 = vpop.f32.mrf.mxu0
      %v567 = vadd.f32 0.0, %v566
      %v568 = vpop.f32.mrf.mxu0
      %569 = vmatprep.mubr.f32.mxu0 0.0
      %570 = vmatmul.mubr.f32.gmra.mxu0 %v436
      %v571 = vpop.f32.mrf.mxu0
      %v572 = vadd.f32 0.0, %v571
      %v573 = vpop.f32.mrf.mxu0
      %574 = vmatprep.mubr.f32.mxu0 0.0
      %575 = vmatmul.mubr.f32.gmra.mxu0 %v439
      %v576 = vpop.f32.mrf.mxu0
      %v577 = vadd.f32 0.0, %v576
      %v578 = vpop.f32.mrf.mxu0
      %579 = vmatprep.mubr.f32.mxu0 0.0
      %580 = vmatmul.mubr.f32.gmra.mxu0 %v442
      %v581 = vpop.f32.mrf.mxu0
      %v582 = vadd.f32 0.0, %v581
      %v583 = vpop.f32.mrf.mxu0
      %584 = vmatprep.mubr.f32.mxu0 0.0
      %585 = vmatmul.mubr.f32.gmra.mxu0 %v445
      %v586 = vpop.f32.mrf.mxu0
      %v587 = vadd.f32 0.0, %v586
      %v588 = vpop.f32.mrf.mxu0
      %589 = vmatprep.mubr.f32.mxu0 0.0
      %590 = vmatmul.mubr.f32.gmra.mxu0 %v448
      %v591 = vpop.f32.mrf.mxu0
      %v592 = vadd.f32 0.0, %v591
      %v593 = vpop.f32.mrf.mxu0
      %594 = vdwg.mxu0
      %v595 = vld [vmem:[%s2] sm:$0xff]
      %v596 = vld [vmem:[%s2 + $0x8] sm:$0xff]
      %v597 = vld [vmem:[%s2 + $0x10] sm:$0xff]
      %v598 = vld [vmem:[%s2 + $0x18] sm:$0xff]
      %vm615 = vcmask 1046528
      %v616 = vrot.slane %v517, 1
      %v617 = vrot.slane %v522, 1
      %v618 = vsel %vm615, %v616, %v617
      %v619 = vrot.slane %v527, 1
      %v620 = vsel %vm615, %v617, %v619
      %v621 = vrot.slane %v532, 1
      %v622 = vsel %vm615, %v619, %v621
      %v623 = vrot.slane %v537, 1
      %v624 = vsel %vm615, %v621, %v623
      %v625 = vrot.slane %v542, 1
      %v626 = vsel %vm615, %v623, %v625
      %v627 = vrot.slane %v547, 1
      %v628 = vsel %vm615, %v625, %v627
      %v629 = vrot.slane %v552, 1
      %v630 = vsel %vm615, %v627, %v629
      %v631 = vrot.slane %v557, 1
      %v632 = vsel %vm615, %v629, %v631
      %v633 = vrot.slane %v562, 1
      %v634 = vsel %vm615, %v631, %v633
      %v635 = vrot.slane %v567, 1
      %v636 = vsel %vm615, %v633, %v635
      %v637 = vrot.slane %v572, 1
      %v638 = vsel %vm615, %v635, %v637
      %v639 = vrot.slane %v577, 1
      %v640 = vsel %vm615, %v637, %v639
      %v641 = vrot.slane %v582, 1
      %v642 = vsel %vm615, %v639, %v641
      %v643 = vrot.slane %v587, 1
      %v644 = vsel %vm615, %v641, %v643
      %v645 = vrot.slane %v592, 1
      %v646 = vsel %vm615, %v643, %v645
      %v648 = vsel %vm615, %v645, 0.0
      %s649 = scalar_lea.vmem %s2, 32
      %v650 = vld [vmem:[%s649] sm:$0xff]
      %v651 = vld [vmem:[%s649 + $0x8] sm:$0xff]
      %v652 = vld [vmem:[%s649 + $0x10] sm:$0xff]
      %v653 = vld [vmem:[%s649 + $0x18] sm:$0xff]
      %vm654 = vcmask 261120
      %v655 = vsel %vm654, %v618, 0
      %v657 = vsel %vm654, %v620, 0
      %v659 = vsel %vm654, %v622, 0
      %v661 = vsel %vm654, %v624, 0
      %v663 = vsel %vm654, %v626, 0
      %v665 = vsel %vm654, %v628, 0
      %v667 = vsel %vm654, %v630, 0
      %v669 = vsel %vm654, %v632, 0
      %v671 = vsel %vm654, %v634, 0
      %v673 = vsel %vm654, %v636, 0
      %v675 = vsel %vm654, %v638, 0
      %v677 = vsel %vm654, %v640, 0
      %v679 = vsel %vm654, %v642, 0
      %v681 = vsel %vm654, %v644, 0
      %v683 = vsel %vm654, %v646, 0
      %v686 = vsel %vm654, %v648, 0
      %688 = vmatprep.subr.mxu0 0.0
      %689 = vmatpush1.msra.mxu0 0.0
      %690 = vmatprep.subr.mxu0 0.0
      %691 = vmatpush1.msra.mxu0 0.0
      %692 = vmatprep.subr.mxu0 0.0
      %693 = vmatpush1.msra.mxu0 0.0
      %694 = vmatprep.subr.mxu0 0.0
      %695 = vmatpush1.msra.mxu0 0.0
      %696 = vmatprep.subr.mxu0 0.0
      %697 = vmatpush1.msra.mxu0 0.0
      %698 = vmatprep.subr.mxu0 0.0
      %699 = vmatpush1.msra.mxu0 0.0
      %700 = vmatprep.subr.mxu0 0.0
      %701 = vmatpush1.msra.mxu0 0.0
      %702 = vmatprep.subr.mxu0 0.0
      %703 = vmatpush1.msra.mxu0 0.0
      %704 = vmatprep.subr.mxu0 0.0
      %705 = vmatpush1.msra.mxu0 0.0
      %706 = vmatprep.subr.mxu0 0.0
      %707 = vmatpush1.msra.mxu0 0.0
      %708 = vmatprep.subr.mxu0 0.0
      %709 = vmatpush1.msra.mxu0 0.0
      %710 = vmatprep.subr.mxu0 0.0
      %711 = vmatpush1.msra.mxu0 0.0
      %712 = vmatprep.subr.mxu0 0.0
      %713 = vmatpush1.msra.mxu0 %v653
      %714 = vmatprep.subr.mxu0 0.0
      %715 = vmatpush1.msra.mxu0 %v652
      %716 = vmatprep.subr.mxu0 0.0
      %717 = vmatpush1.msra.mxu0 %v651
      %718 = vmatprep.subr.mxu0 0.0
      %719 = vmatpush1.msra.mxu0 %v650
      %720 = vmatprep.subr.mxu0 0.0
      %721 = vmatpush2.msra.mxu0 0.0
      %722 = vmatprep.subr.mxu0 0.0
      %723 = vmatpush2.msra.mxu0 0.0
      %724 = vmatprep.subr.mxu0 0.0
      %725 = vmatpush2.msra.mxu0 0.0
      %726 = vmatprep.subr.mxu0 0.0
      %727 = vmatpush2.msra.mxu0 0.0
      %728 = vmatprep.subr.mxu0 0.0
      %729 = vmatpush2.msra.mxu0 0.0
      %730 = vmatprep.subr.mxu0 0.0
      %731 = vmatpush2.msra.mxu0 0.0
      %732 = vmatprep.subr.mxu0 0.0
      %733 = vmatpush2.msra.mxu0 0.0
      %734 = vmatprep.subr.mxu0 0.0
      %735 = vmatpush2.msra.mxu0 0.0
      %736 = vmatprep.subr.mxu0 0.0
      %737 = vmatpush2.msra.mxu0 0.0
      %738 = vmatprep.subr.mxu0 0.0
      %739 = vmatpush2.msra.mxu0 0.0
      %740 = vmatprep.subr.mxu0 0.0
      %741 = vmatpush2.msra.mxu0 0.0
      %742 = vmatprep.subr.mxu0 0.0
      %743 = vmatpush2.msra.mxu0 0.0
      %744 = vmatprep.subr.mxu0 0.0
      %745 = vmatpush2.msra.mxu0 0.0
      %746 = vmatprep.subr.mxu0 0.0
      %747 = vmatpush2.msra.mxu0 0.0
      %748 = vmatprep.subr.mxu0 0.0
      %749 = vmatpush2.msra.mxu0 0.0
      %750 = vmatprep.subr.mxu0 0.0
      %751 = vmatpush2.msra.mxu0 0.0
      %752 = vmatprep.mubr.f32.mxu0 0.0
      %753 = vmatmul.mubr.f32.gmra.mxu0 %v655
      %v754 = vpop.f32.mrf.mxu0
      %v755 = vadd.f32 0.0, %v754
      %v756 = vpop.f32.mrf.mxu0
      %757 = vmatprep.mubr.f32.mxu0 0.0
      %758 = vmatmul.mubr.f32.gmra.mxu0 %v657
      %v759 = vpop.f32.mrf.mxu0
      %v760 = vadd.f32 0.0, %v759
      %v761 = vpop.f32.mrf.mxu0
      %762 = vmatprep.mubr.f32.mxu0 0.0
      %763 = vmatmul.mubr.f32.gmra.mxu0 %v659
      %v764 = vpop.f32.mrf.mxu0
      %v765 = vadd.f32 0.0, %v764
      %v766 = vpop.f32.mrf.mxu0
      %767 = vmatprep.mubr.f32.mxu0 0.0
      %768 = vmatmul.mubr.f32.gmra.mxu0 %v661
      %v769 = vpop.f32.mrf.mxu0
      %v770 = vadd.f32 0.0, %v769
      %v771 = vpop.f32.mrf.mxu0
      %772 = vmatprep.mubr.f32.mxu0 0.0
      %773 = vmatmul.mubr.f32.gmra.mxu0 %v663
      %v774 = vpop.f32.mrf.mxu0
      %v775 = vadd.f32 0.0, %v774
      %v776 = vpop.f32.mrf.mxu0
      %777 = vmatprep.mubr.f32.mxu0 0.0
      %778 = vmatmul.mubr.f32.gmra.mxu0 %v665
      %v779 = vpop.f32.mrf.mxu0
      %v780 = vadd.f32 0.0, %v779
      %v781 = vpop.f32.mrf.mxu0
      %782 = vmatprep.mubr.f32.mxu0 0.0
      %783 = vmatmul.mubr.f32.gmra.mxu0 %v667
      %v784 = vpop.f32.mrf.mxu0
      %v785 = vadd.f32 0.0, %v784
      %v786 = vpop.f32.mrf.mxu0
      %787 = vmatprep.mubr.f32.mxu0 0.0
      %788 = vmatmul.mubr.f32.gmra.mxu0 %v669
      %v789 = vpop.f32.mrf.mxu0
      %v790 = vadd.f32 0.0, %v789
      %v791 = vpop.f32.mrf.mxu0
      %792 = vmatprep.mubr.f32.mxu0 0.0
      %793 = vmatmul.mubr.f32.gmra.mxu0 %v671
      %v794 = vpop.f32.mrf.mxu0
      %v795 = vadd.f32 0.0, %v794
      %v796 = vpop.f32.mrf.mxu0
      %797 = vmatprep.mubr.f32.mxu0 0.0
      %798 = vmatmul.mubr.f32.gmra.mxu0 %v673
      %v799 = vpop.f32.mrf.mxu0
      %v800 = vadd.f32 0.0, %v799
      %v801 = vpop.f32.mrf.mxu0
      %802 = vmatprep.mubr.f32.mxu0 0.0
      %803 = vmatmul.mubr.f32.gmra.mxu0 %v675
      %v804 = vpop.f32.mrf.mxu0
      %v805 = vadd.f32 0.0, %v804
      %v806 = vpop.f32.mrf.mxu0
      %807 = vmatprep.mubr.f32.mxu0 0.0
      %808 = vmatmul.mubr.f32.gmra.mxu0 %v677
      %v809 = vpop.f32.mrf.mxu0
      %v810 = vadd.f32 0.0, %v809
      %v811 = vpop.f32.mrf.mxu0
      %812 = vmatprep.mubr.f32.mxu0 0.0
      %813 = vmatmul.mubr.f32.gmra.mxu0 %v679
      %v814 = vpop.f32.mrf.mxu0
      %v815 = vadd.f32 0.0, %v814
      %v816 = vpop.f32.mrf.mxu0
      %817 = vmatprep.mubr.f32.mxu0 0.0
      %818 = vmatmul.mubr.f32.gmra.mxu0 %v681
      %v819 = vpop.f32.mrf.mxu0
      %v820 = vadd.f32 0.0, %v819
      %v821 = vpop.f32.mrf.mxu0
      %822 = vmatprep.mubr.f32.mxu0 0.0
      %823 = vmatmul.mubr.f32.gmra.mxu0 %v683
      %v824 = vpop.f32.mrf.mxu0
      %v825 = vadd.f32 0.0, %v824
      %v826 = vpop.f32.mrf.mxu0
      %827 = vmatprep.mubr.f32.mxu0 0.0
      %828 = vmatmul.mubr.f32.gmra.mxu0 %v686
      %v829 = vpop.f32.mrf.mxu0
      %v830 = vadd.f32 0.0, %v829
      %v831 = vpop.f32.mrf.mxu0
      %832 = vdwg.mxu0
      %v833 = vsel %vm654, %v517, 0
      %v835 = vsel %vm654, %v522, 0
      %v837 = vsel %vm654, %v527, 0
      %v839 = vsel %vm654, %v532, 0
      %v841 = vsel %vm654, %v537, 0
      %v843 = vsel %vm654, %v542, 0
      %v845 = vsel %vm654, %v547, 0
      %v847 = vsel %vm654, %v552, 0
      %v849 = vsel %vm654, %v557, 0
      %v851 = vsel %vm654, %v562, 0
      %v853 = vsel %vm654, %v567, 0
      %v855 = vsel %vm654, %v572, 0
      %v857 = vsel %vm654, %v577, 0
      %v859 = vsel %vm654, %v582, 0
      %v861 = vsel %vm654, %v587, 0
      %v863 = vsel %vm654, %v592, 0
      %865 = vmatprep.subr.mxu0 0.0
      %866 = vmatpush1.msra.mxu0 0.0
      %867 = vmatprep.subr.mxu0 0.0
      %868 = vmatpush1.msra.mxu0 0.0
      %869 = vmatprep.subr.mxu0 0.0
      %870 = vmatpush1.msra.mxu0 0.0
      %871 = vmatprep.subr.mxu0 0.0
      %872 = vmatpush1.msra.mxu0 0.0
      %873 = vmatprep.subr.mxu0 0.0
      %874 = vmatpush1.msra.mxu0 0.0
      %875 = vmatprep.subr.mxu0 0.0
      %876 = vmatpush1.msra.mxu0 0.0
      %877 = vmatprep.subr.mxu0 0.0
      %878 = vmatpush1.msra.mxu0 0.0
      %879 = vmatprep.subr.mxu0 0.0
      %880 = vmatpush1.msra.mxu0 0.0
      %881 = vmatprep.subr.mxu0 0.0
      %882 = vmatpush1.msra.mxu0 0.0
      %883 = vmatprep.subr.mxu0 0.0
      %884 = vmatpush1.msra.mxu0 0.0
      %885 = vmatprep.subr.mxu0 0.0
      %886 = vmatpush1.msra.mxu0 0.0
      %887 = vmatprep.subr.mxu0 0.0
      %888 = vmatpush1.msra.mxu0 0.0
      %889 = vmatprep.subr.mxu0 0.0
      %890 = vmatpush1.msra.mxu0 %v598
      %891 = vmatprep.subr.mxu0 0.0
      %892 = vmatpush1.msra.mxu0 %v597
      %893 = vmatprep.subr.mxu0 0.0
      %894 = vmatpush1.msra.mxu0 %v596
      %895 = vmatprep.subr.mxu0 0.0
      %896 = vmatpush1.msra.mxu0 %v595
      %897 = vmatprep.subr.mxu0 0.0
      %898 = vmatpush2.msra.mxu0 0.0
      %899 = vmatprep.subr.mxu0 0.0
      %900 = vmatpush2.msra.mxu0 0.0
      %901 = vmatprep.subr.mxu0 0.0
      %902 = vmatpush2.msra.mxu0 0.0
      %903 = vmatprep.subr.mxu0 0.0
      %904 = vmatpush2.msra.mxu0 0.0
      %905 = vmatprep.subr.mxu0 0.0
      %906 = vmatpush2.msra.mxu0 0.0
      %907 = vmatprep.subr.mxu0 0.0
      %908 = vmatpush2.msra.mxu0 0.0
      %909 = vmatprep.subr.mxu0 0.0
      %910 = vmatpush2.msra.mxu0 0.0
      %911 = vmatprep.subr.mxu0 0.0
      %912 = vmatpush2.msra.mxu0 0.0
      %913 = vmatprep.subr.mxu0 0.0
      %914 = vmatpush2.msra.mxu0 0.0
      %915 = vmatprep.subr.mxu0 0.0
      %916 = vmatpush2.msra.mxu0 0.0
      %917 = vmatprep.subr.mxu0 0.0
      %918 = vmatpush2.msra.mxu0 0.0
      %919 = vmatprep.subr.mxu0 0.0
      %920 = vmatpush2.msra.mxu0 0.0
      %921 = vmatprep.subr.mxu0 0.0
      %922 = vmatpush2.msra.mxu0 0.0
      %923 = vmatprep.subr.mxu0 0.0
      %924 = vmatpush2.msra.mxu0 0.0
      %925 = vmatprep.subr.mxu0 0.0
      %926 = vmatpush2.msra.mxu0 0.0
      %927 = vmatprep.subr.mxu0 0.0
      %928 = vmatpush2.msra.mxu0 0.0
      %929 = vmatprep.mubr.f32.mxu0 0.0
      %930 = vmatmul.mubr.f32.gmra.mxu0 %v833
      %v931 = vpop.f32.mrf.mxu0
      %v932 = vadd.f32 %v755, %v931
      %v933 = vpop.f32.mrf.mxu0
      %934 = vmatprep.mubr.f32.mxu0 0.0
      %935 = vmatmul.mubr.f32.gmra.mxu0 %v835
      %v936 = vpop.f32.mrf.mxu0
      %v937 = vadd.f32 %v760, %v936
      %v938 = vpop.f32.mrf.mxu0
      %939 = vmatprep.mubr.f32.mxu0 0.0
      %940 = vmatmul.mubr.f32.gmra.mxu0 %v837
      %v941 = vpop.f32.mrf.mxu0
      %v942 = vadd.f32 %v765, %v941
      %v943 = vpop.f32.mrf.mxu0
      %944 = vmatprep.mubr.f32.mxu0 0.0
      %945 = vmatmul.mubr.f32.gmra.mxu0 %v839
      %v946 = vpop.f32.mrf.mxu0
      %v947 = vadd.f32 %v770, %v946
      %v948 = vpop.f32.mrf.mxu0
      %949 = vmatprep.mubr.f32.mxu0 0.0
      %950 = vmatmul.mubr.f32.gmra.mxu0 %v841
      %v951 = vpop.f32.mrf.mxu0
      %v952 = vadd.f32 %v775, %v951
      %v953 = vpop.f32.mrf.mxu0
      %954 = vmatprep.mubr.f32.mxu0 0.0
      %955 = vmatmul.mubr.f32.gmra.mxu0 %v843
      %v956 = vpop.f32.mrf.mxu0
      %v957 = vadd.f32 %v780, %v956
      %v958 = vpop.f32.mrf.mxu0
      %959 = vmatprep.mubr.f32.mxu0 0.0
      %960 = vmatmul.mubr.f32.gmra.mxu0 %v845
      %v961 = vpop.f32.mrf.mxu0
      %v962 = vadd.f32 %v785, %v961
      %v963 = vpop.f32.mrf.mxu0
      %964 = vmatprep.mubr.f32.mxu0 0.0
      %965 = vmatmul.mubr.f32.gmra.mxu0 %v847
      %v966 = vpop.f32.mrf.mxu0
      %v967 = vadd.f32 %v790, %v966
      %v968 = vpop.f32.mrf.mxu0
      %969 = vmatprep.mubr.f32.mxu0 0.0
      %970 = vmatmul.mubr.f32.gmra.mxu0 %v849
      %v971 = vpop.f32.mrf.mxu0
      %v972 = vadd.f32 %v795, %v971
      %v973 = vpop.f32.mrf.mxu0
      %974 = vmatprep.mubr.f32.mxu0 0.0
      %975 = vmatmul.mubr.f32.gmra.mxu0 %v851
      %v976 = vpop.f32.mrf.mxu0
      %v977 = vadd.f32 %v800, %v976
      %v978 = vpop.f32.mrf.mxu0
      %979 = vmatprep.mubr.f32.mxu0 0.0
      %980 = vmatmul.mubr.f32.gmra.mxu0 %v853
      %v981 = vpop.f32.mrf.mxu0
      %v982 = vadd.f32 %v805, %v981
      %v983 = vpop.f32.mrf.mxu0
      %984 = vmatprep.mubr.f32.mxu0 0.0
      %985 = vmatmul.mubr.f32.gmra.mxu0 %v855
      %v986 = vpop.f32.mrf.mxu0
      %v987 = vadd.f32 %v810, %v986
      %v988 = vpop.f32.mrf.mxu0
      %989 = vmatprep.mubr.f32.mxu0 0.0
      %990 = vmatmul.mubr.f32.gmra.mxu0 %v857
      %v991 = vpop.f32.mrf.mxu0
      %v992 = vadd.f32 %v815, %v991
      %v993 = vpop.f32.mrf.mxu0
      %994 = vmatprep.mubr.f32.mxu0 0.0
      %995 = vmatmul.mubr.f32.gmra.mxu0 %v859
      %v996 = vpop.f32.mrf.mxu0
      %v997 = vadd.f32 %v820, %v996
      %v998 = vpop.f32.mrf.mxu0
      %999 = vmatprep.mubr.f32.mxu0 0.0
      %1000 = vmatmul.mubr.f32.gmra.mxu0 %v861
      %v1001 = vpop.f32.mrf.mxu0
      %v1002 = vadd.f32 %v825, %v1001
      %v1003 = vpop.f32.mrf.mxu0
      %1004 = vmatprep.mubr.f32.mxu0 0.0
      %1005 = vmatmul.mubr.f32.gmra.mxu0 %v863
      %v1006 = vpop.f32.mrf.mxu0
      %v1007 = vadd.f32 %v830, %v1006
      %v1008 = vpop.f32.mrf.mxu0
      %1009 = vdwg.mxu0
      %vm1010 = vcmask 1045504
      %v1011 = vrot.slane %v517, 2
      %v1012 = vrot.slane %v522, 2
      %v1013 = vsel %vm1010, %v1011, %v1012
      %v1014 = vrot.slane %v527, 2
      %v1015 = vsel %vm1010, %v1012, %v1014
      %v1016 = vrot.slane %v532, 2
      %v1017 = vsel %vm1010, %v1014, %v1016
      %v1018 = vrot.slane %v537, 2
      %v1019 = vsel %vm1010, %v1016, %v1018
      %v1020 = vrot.slane %v542, 2
      %v1021 = vsel %vm1010, %v1018, %v1020
      %v1022 = vrot.slane %v547, 2
      %v1023 = vsel %vm1010, %v1020, %v1022
      %v1024 = vrot.slane %v552, 2
      %v1025 = vsel %vm1010, %v1022, %v1024
      %v1026 = vrot.slane %v557, 2
      %v1027 = vsel %vm1010, %v1024, %v1026
      %v1028 = vrot.slane %v562, 2
      %v1029 = vsel %vm1010, %v1026, %v1028
      %v1030 = vrot.slane %v567, 2
      %v1031 = vsel %vm1010, %v1028, %v1030
      %v1032 = vrot.slane %v572, 2
      %v1033 = vsel %vm1010, %v1030, %v1032
      %v1034 = vrot.slane %v577, 2
      %v1035 = vsel %vm1010, %v1032, %v1034
      %v1036 = vrot.slane %v582, 2
      %v1037 = vsel %vm1010, %v1034, %v1036
      %v1038 = vrot.slane %v587, 2
      %v1039 = vsel %vm1010, %v1036, %v1038
      %v1040 = vrot.slane %v592, 2
      %v1041 = vsel %vm1010, %v1038, %v1040
      %v1043 = vsel %vm1010, %v1040, 0.0
      %s1044 = scalar_lea.vmem %s2, 64
      %v1045 = vld [vmem:[%s1044] sm:$0xff]
      %v1046 = vld [vmem:[%s1044 + $0x8] sm:$0xff]
      %v1047 = vld [vmem:[%s1044 + $0x10] sm:$0xff]
      %v1048 = vld [vmem:[%s1044 + $0x18] sm:$0xff]
      %v1049 = vsel %vm654, %v1013, 0
      %v1051 = vsel %vm654, %v1015, 0
      %v1053 = vsel %vm654, %v1017, 0
      %v1055 = vsel %vm654, %v1019, 0
      %v1057 = vsel %vm654, %v1021, 0
      %v1059 = vsel %vm654, %v1023, 0
      %v1061 = vsel %vm654, %v1025, 0
      %v1063 = vsel %vm654, %v1027, 0
      %v1065 = vsel %vm654, %v1029, 0
      %v1067 = vsel %vm654, %v1031, 0
      %v1069 = vsel %vm654, %v1033, 0
      %v1071 = vsel %vm654, %v1035, 0
      %v1073 = vsel %vm654, %v1037, 0
      %v1075 = vsel %vm654, %v1039, 0
      %v1077 = vsel %vm654, %v1041, 0
      %v1080 = vsel %vm654, %v1043, 0
      %1082 = vmatprep.subr.mxu0 0.0
      %1083 = vmatpush1.msra.mxu0 0.0
      %1084 = vmatprep.subr.mxu0 0.0
      %1085 = vmatpush1.msra.mxu0 0.0
      %1086 = vmatprep.subr.mxu0 0.0
      %1087 = vmatpush1.msra.mxu0 0.0
      %1088 = vmatprep.subr.mxu0 0.0
      %1089 = vmatpush1.msra.mxu0 0.0
      %1090 = vmatprep.subr.mxu0 0.0
      %1091 = vmatpush1.msra.mxu0 0.0
      %1092 = vmatprep.subr.mxu0 0.0
      %1093 = vmatpush1.msra.mxu0 0.0
      %1094 = vmatprep.subr.mxu0 0.0
      %1095 = vmatpush1.msra.mxu0 0.0
      %1096 = vmatprep.subr.mxu0 0.0
      %1097 = vmatpush1.msra.mxu0 0.0
      %1098 = vmatprep.subr.mxu0 0.0
      %1099 = vmatpush1.msra.mxu0 0.0
      %1100 = vmatprep.subr.mxu0 0.0
      %1101 = vmatpush1.msra.mxu0 0.0
      %1102 = vmatprep.subr.mxu0 0.0
      %1103 = vmatpush1.msra.mxu0 0.0
      %1104 = vmatprep.subr.mxu0 0.0
      %1105 = vmatpush1.msra.mxu0 0.0
      %1106 = vmatprep.subr.mxu0 0.0
      %1107 = vmatpush1.msra.mxu0 %v1048
      %1108 = vmatprep.subr.mxu0 0.0
      %1109 = vmatpush1.msra.mxu0 %v1047
      %1110 = vmatprep.subr.mxu0 0.0
      %1111 = vmatpush1.msra.mxu0 %v1046
      %1112 = vmatprep.subr.mxu0 0.0
      %1113 = vmatpush1.msra.mxu0 %v1045
      %1114 = vmatprep.subr.mxu0 0.0
      %1115 = vmatpush2.msra.mxu0 0.0
      %1116 = vmatprep.subr.mxu0 0.0
      %1117 = vmatpush2.msra.mxu0 0.0
      %1118 = vmatprep.subr.mxu0 0.0
      %1119 = vmatpush2.msra.mxu0 0.0
      %1120 = vmatprep.subr.mxu0 0.0
      %1121 = vmatpush2.msra.mxu0 0.0
      %1122 = vmatprep.subr.mxu0 0.0
      %1123 = vmatpush2.msra.mxu0 0.0
      %1124 = vmatprep.subr.mxu0 0.0
      %1125 = vmatpush2.msra.mxu0 0.0
      %1126 = vmatprep.subr.mxu0 0.0
      %1127 = vmatpush2.msra.mxu0 0.0
      %1128 = vmatprep.subr.mxu0 0.0
      %1129 = vmatpush2.msra.mxu0 0.0
      %1130 = vmatprep.subr.mxu0 0.0
      %1131 = vmatpush2.msra.mxu0 0.0
      %1132 = vmatprep.subr.mxu0 0.0
      %1133 = vmatpush2.msra.mxu0 0.0
      %1134 = vmatprep.subr.mxu0 0.0
      %1135 = vmatpush2.msra.mxu0 0.0
      %1136 = vmatprep.subr.mxu0 0.0
      %1137 = vmatpush2.msra.mxu0 0.0
      %1138 = vmatprep.subr.mxu0 0.0
      %1139 = vmatpush2.msra.mxu0 0.0
      %1140 = vmatprep.subr.mxu0 0.0
      %1141 = vmatpush2.msra.mxu0 0.0
      %1142 = vmatprep.subr.mxu0 0.0
      %1143 = vmatpush2.msra.mxu0 0.0
      %1144 = vmatprep.subr.mxu0 0.0
      %1145 = vmatpush2.msra.mxu0 0.0
      %1146 = vmatprep.mubr.f32.mxu0 0.0
      %1147 = vmatmul.mubr.f32.gmra.mxu0 %v1049
      %v1148 = vpop.f32.mrf.mxu0
      %v1149 = vadd.f32 0.0, %v1148
      %v1150 = vpop.f32.mrf.mxu0
      %1151 = vmatprep.mubr.f32.mxu0 0.0
      %1152 = vmatmul.mubr.f32.gmra.mxu0 %v1051
      %v1153 = vpop.f32.mrf.mxu0
      %v1154 = vadd.f32 0.0, %v1153
      %v1155 = vpop.f32.mrf.mxu0
      %1156 = vmatprep.mubr.f32.mxu0 0.0
      %1157 = vmatmul.mubr.f32.gmra.mxu0 %v1053
      %v1158 = vpop.f32.mrf.mxu0
      %v1159 = vadd.f32 0.0, %v1158
      %v1160 = vpop.f32.mrf.mxu0
      %1161 = vmatprep.mubr.f32.mxu0 0.0
      %1162 = vmatmul.mubr.f32.gmra.mxu0 %v1055
      %v1163 = vpop.f32.mrf.mxu0
      %v1164 = vadd.f32 0.0, %v1163
      %v1165 = vpop.f32.mrf.mxu0
      %1166 = vmatprep.mubr.f32.mxu0 0.0
      %1167 = vmatmul.mubr.f32.gmra.mxu0 %v1057
      %v1168 = vpop.f32.mrf.mxu0
      %v1169 = vadd.f32 0.0, %v1168
      %v1170 = vpop.f32.mrf.mxu0
      %1171 = vmatprep.mubr.f32.mxu0 0.0
      %1172 = vmatmul.mubr.f32.gmra.mxu0 %v1059
      %v1173 = vpop.f32.mrf.mxu0
      %v1174 = vadd.f32 0.0, %v1173
      %v1175 = vpop.f32.mrf.mxu0
      %1176 = vmatprep.mubr.f32.mxu0 0.0
      %1177 = vmatmul.mubr.f32.gmra.mxu0 %v1061
      %v1178 = vpop.f32.mrf.mxu0
      %v1179 = vadd.f32 0.0, %v1178
      %v1180 = vpop.f32.mrf.mxu0
      %1181 = vmatprep.mubr.f32.mxu0 0.0
      %1182 = vmatmul.mubr.f32.gmra.mxu0 %v1063
      %v1183 = vpop.f32.mrf.mxu0
      %v1184 = vadd.f32 0.0, %v1183
      %v1185 = vpop.f32.mrf.mxu0
      %1186 = vmatprep.mubr.f32.mxu0 0.0
      %1187 = vmatmul.mubr.f32.gmra.mxu0 %v1065
      %v1188 = vpop.f32.mrf.mxu0
      %v1189 = vadd.f32 0.0, %v1188
      %v1190 = vpop.f32.mrf.mxu0
      %1191 = vmatprep.mubr.f32.mxu0 0.0
      %1192 = vmatmul.mubr.f32.gmra.mxu0 %v1067
      %v1193 = vpop.f32.mrf.mxu0
      %v1194 = vadd.f32 0.0, %v1193
      %v1195 = vpop.f32.mrf.mxu0
      %1196 = vmatprep.mubr.f32.mxu0 0.0
      %1197 = vmatmul.mubr.f32.gmra.mxu0 %v1069
      %v1198 = vpop.f32.mrf.mxu0
      %v1199 = vadd.f32 0.0, %v1198
      %v1200 = vpop.f32.mrf.mxu0
      %1201 = vmatprep.mubr.f32.mxu0 0.0
      %1202 = vmatmul.mubr.f32.gmra.mxu0 %v1071
      %v1203 = vpop.f32.mrf.mxu0
      %v1204 = vadd.f32 0.0, %v1203
      %v1205 = vpop.f32.mrf.mxu0
      %1206 = vmatprep.mubr.f32.mxu0 0.0
      %1207 = vmatmul.mubr.f32.gmra.mxu0 %v1073
      %v1208 = vpop.f32.mrf.mxu0
      %v1209 = vadd.f32 0.0, %v1208
      %v1210 = vpop.f32.mrf.mxu0
      %1211 = vmatprep.mubr.f32.mxu0 0.0
      %1212 = vmatmul.mubr.f32.gmra.mxu0 %v1075
      %v1213 = vpop.f32.mrf.mxu0
      %v1214 = vadd.f32 0.0, %v1213
      %v1215 = vpop.f32.mrf.mxu0
      %1216 = vmatprep.mubr.f32.mxu0 0.0
      %1217 = vmatmul.mubr.f32.gmra.mxu0 %v1077
      %v1218 = vpop.f32.mrf.mxu0
      %v1219 = vadd.f32 0.0, %v1218
      %v1220 = vpop.f32.mrf.mxu0
      %1221 = vmatprep.mubr.f32.mxu0 0.0
      %1222 = vmatmul.mubr.f32.gmra.mxu0 %v1080
      %v1223 = vpop.f32.mrf.mxu0
      %v1224 = vadd.f32 0.0, %v1223
      %v1225 = vpop.f32.mrf.mxu0
      %1226 = vdwg.mxu0
      %v1227 = vadd.f32 %v932, %v1149
      %v1228 = vadd.f32 %v937, %v1154
      %v1229 = vadd.f32 %v942, %v1159
      %v1230 = vadd.f32 %v947, %v1164
      %v1231 = vadd.f32 %v952, %v1169
      %v1232 = vadd.f32 %v957, %v1174
      %v1233 = vadd.f32 %v962, %v1179
      %v1234 = vadd.f32 %v967, %v1184
      %v1235 = vadd.f32 %v972, %v1189
      %v1236 = vadd.f32 %v977, %v1194
      %v1237 = vadd.f32 %v982, %v1199
      %v1238 = vadd.f32 %v987, %v1204
      %v1239 = vadd.f32 %v992, %v1209
      %v1240 = vadd.f32 %v997, %v1214
      %v1241 = vadd.f32 %v1002, %v1219
      %v1242 = vadd.f32 %v1007, %v1224
      %vm1243 = vcmask 1044480
      %v1244 = vrot.slane %v517, 3
      %v1245 = vrot.slane %v522, 3
      %v1246 = vsel %vm1243, %v1244, %v1245
      %v1247 = vrot.slane %v527, 3
      %v1248 = vsel %vm1243, %v1245, %v1247
      %v1249 = vrot.slane %v532, 3
      %v1250 = vsel %vm1243, %v1247, %v1249
      %v1251 = vrot.slane %v537, 3
      %v1252 = vsel %vm1243, %v1249, %v1251
      %v1253 = vrot.slane %v542, 3
      %v1254 = vsel %vm1243, %v1251, %v1253
      %v1255 = vrot.slane %v547, 3
      %v1256 = vsel %vm1243, %v1253, %v1255
      %v1257 = vrot.slane %v552, 3
      %v1258 = vsel %vm1243, %v1255, %v1257
      %v1259 = vrot.slane %v557, 3
      %v1260 = vsel %vm1243, %v1257, %v1259
      %v1261 = vrot.slane %v562, 3
      %v1262 = vsel %vm1243, %v1259, %v1261
      %v1263 = vrot.slane %v567, 3
      %v1264 = vsel %vm1243, %v1261, %v1263
      %v1265 = vrot.slane %v572, 3
      %v1266 = vsel %vm1243, %v1263, %v1265
      %v1267 = vrot.slane %v577, 3
      %v1268 = vsel %vm1243, %v1265, %v1267
      %v1269 = vrot.slane %v582, 3
      %v1270 = vsel %vm1243, %v1267, %v1269
      %v1271 = vrot.slane %v587, 3
      %v1272 = vsel %vm1243, %v1269, %v1271
      %v1273 = vrot.slane %v592, 3
      %v1274 = vsel %vm1243, %v1271, %v1273
      %v1276 = vsel %vm1243, %v1273, 0.0
      %s1277 = scalar_lea.vmem %s2, 96
      %v1278 = vld [vmem:[%s1277] sm:$0xff]
      %v1279 = vld [vmem:[%s1277 + $0x8] sm:$0xff]
      %v1280 = vld [vmem:[%s1277 + $0x10] sm:$0xff]
      %v1281 = vld [vmem:[%s1277 + $0x18] sm:$0xff]
      %v1282 = vsel %vm654, %v1246, 0
      %v1284 = vsel %vm654, %v1248, 0
      %v1286 = vsel %vm654, %v1250, 0
      %v1288 = vsel %vm654, %v1252, 0
      %v1290 = vsel %vm654, %v1254, 0
      %v1292 = vsel %vm654, %v1256, 0
      %v1294 = vsel %vm654, %v1258, 0
      %v1296 = vsel %vm654, %v1260, 0
      %v1298 = vsel %vm654, %v1262, 0
      %v1300 = vsel %vm654, %v1264, 0
      %v1302 = vsel %vm654, %v1266, 0
      %v1304 = vsel %vm654, %v1268, 0
      %v1306 = vsel %vm654, %v1270, 0
      %v1308 = vsel %vm654, %v1272, 0
      %v1310 = vsel %vm654, %v1274, 0
      %v1313 = vsel %vm654, %v1276, 0
      %1315 = vmatprep.subr.mxu0 0.0
      %1316 = vmatpush1.msra.mxu0 0.0
      %1317 = vmatprep.subr.mxu0 0.0
      %1318 = vmatpush1.msra.mxu0 0.0
      %1319 = vmatprep.subr.mxu0 0.0
      %1320 = vmatpush1.msra.mxu0 0.0
      %1321 = vmatprep.subr.mxu0 0.0
      %1322 = vmatpush1.msra.mxu0 0.0
      %1323 = vmatprep.subr.mxu0 0.0
      %1324 = vmatpush1.msra.mxu0 0.0
      %1325 = vmatprep.subr.mxu0 0.0
      %1326 = vmatpush1.msra.mxu0 0.0
      %1327 = vmatprep.subr.mxu0 0.0
      %1328 = vmatpush1.msra.mxu0 0.0
      %1329 = vmatprep.subr.mxu0 0.0
      %1330 = vmatpush1.msra.mxu0 0.0
      %1331 = vmatprep.subr.mxu0 0.0
      %1332 = vmatpush1.msra.mxu0 0.0
      %1333 = vmatprep.subr.mxu0 0.0
      %1334 = vmatpush1.msra.mxu0 0.0
      %1335 = vmatprep.subr.mxu0 0.0
      %1336 = vmatpush1.msra.mxu0 0.0
      %1337 = vmatprep.subr.mxu0 0.0
      %1338 = vmatpush1.msra.mxu0 0.0
      %1339 = vmatprep.subr.mxu0 0.0
      %1340 = vmatpush1.msra.mxu0 %v1281
      %1341 = vmatprep.subr.mxu0 0.0
      %1342 = vmatpush1.msra.mxu0 %v1280
      %1343 = vmatprep.subr.mxu0 0.0
      %1344 = vmatpush1.msra.mxu0 %v1279
      %1345 = vmatprep.subr.mxu0 0.0
      %1346 = vmatpush1.msra.mxu0 %v1278
      %1347 = vmatprep.subr.mxu0 0.0
      %1348 = vmatpush2.msra.mxu0 0.0
      %1349 = vmatprep.subr.mxu0 0.0
      %1350 = vmatpush2.msra.mxu0 0.0
      %1351 = vmatprep.subr.mxu0 0.0
      %1352 = vmatpush2.msra.mxu0 0.0
      %1353 = vmatprep.subr.mxu0 0.0
      %1354 = vmatpush2.msra.mxu0 0.0
      %1355 = vmatprep.subr.mxu0 0.0
      %1356 = vmatpush2.msra.mxu0 0.0
      %1357 = vmatprep.subr.mxu0 0.0
      %1358 = vmatpush2.msra.mxu0 0.0
      %1359 = vmatprep.subr.mxu0 0.0
      %1360 = vmatpush2.msra.mxu0 0.0
      %1361 = vmatprep.subr.mxu0 0.0
      %1362 = vmatpush2.msra.mxu0 0.0
      %1363 = vmatprep.subr.mxu0 0.0
      %1364 = vmatpush2.msra.mxu0 0.0
      %1365 = vmatprep.subr.mxu0 0.0
      %1366 = vmatpush2.msra.mxu0 0.0
      %1367 = vmatprep.subr.mxu0 0.0
      %1368 = vmatpush2.msra.mxu0 0.0
      %1369 = vmatprep.subr.mxu0 0.0
      %1370 = vmatpush2.msra.mxu0 0.0
      %1371 = vmatprep.subr.mxu0 0.0
      %1372 = vmatpush2.msra.mxu0 0.0
      %1373 = vmatprep.subr.mxu0 0.0
      %1374 = vmatpush2.msra.mxu0 0.0
      %1375 = vmatprep.subr.mxu0 0.0
      %1376 = vmatpush2.msra.mxu0 0.0
      %1377 = vmatprep.subr.mxu0 0.0
      %1378 = vmatpush2.msra.mxu0 0.0
      %1379 = vmatprep.mubr.f32.mxu0 0.0
      %1380 = vmatmul.mubr.f32.gmra.mxu0 %v1282
      %v1381 = vpop.f32.mrf.mxu0
      %v1382 = vadd.f32 0.0, %v1381
      %v1383 = vpop.f32.mrf.mxu0
      %1384 = vmatprep.mubr.f32.mxu0 0.0
      %1385 = vmatmul.mubr.f32.gmra.mxu0 %v1284
      %v1386 = vpop.f32.mrf.mxu0
      %v1387 = vadd.f32 0.0, %v1386
      %v1388 = vpop.f32.mrf.mxu0
      %1389 = vmatprep.mubr.f32.mxu0 0.0
      %1390 = vmatmul.mubr.f32.gmra.mxu0 %v1286
      %v1391 = vpop.f32.mrf.mxu0
      %v1392 = vadd.f32 0.0, %v1391
      %v1393 = vpop.f32.mrf.mxu0
      %1394 = vmatprep.mubr.f32.mxu0 0.0
      %1395 = vmatmul.mubr.f32.gmra.mxu0 %v1288
      %v1396 = vpop.f32.mrf.mxu0
      %v1397 = vadd.f32 0.0, %v1396
      %v1398 = vpop.f32.mrf.mxu0
      %1399 = vmatprep.mubr.f32.mxu0 0.0
      %1400 = vmatmul.mubr.f32.gmra.mxu0 %v1290
      %v1401 = vpop.f32.mrf.mxu0
      %v1402 = vadd.f32 0.0, %v1401
      %v1403 = vpop.f32.mrf.mxu0
      %1404 = vmatprep.mubr.f32.mxu0 0.0
      %1405 = vmatmul.mubr.f32.gmra.mxu0 %v1292
      %v1406 = vpop.f32.mrf.mxu0
      %v1407 = vadd.f32 0.0, %v1406
      %v1408 = vpop.f32.mrf.mxu0
      %1409 = vmatprep.mubr.f32.mxu0 0.0
      %1410 = vmatmul.mubr.f32.gmra.mxu0 %v1294
      %v1411 = vpop.f32.mrf.mxu0
      %v1412 = vadd.f32 0.0, %v1411
      %v1413 = vpop.f32.mrf.mxu0
      %1414 = vmatprep.mubr.f32.mxu0 0.0
      %1415 = vmatmul.mubr.f32.gmra.mxu0 %v1296
      %v1416 = vpop.f32.mrf.mxu0
      %v1417 = vadd.f32 0.0, %v1416
      %v1418 = vpop.f32.mrf.mxu0
      %1419 = vmatprep.mubr.f32.mxu0 0.0
      %1420 = vmatmul.mubr.f32.gmra.mxu0 %v1298
      %v1421 = vpop.f32.mrf.mxu0
      %v1422 = vadd.f32 0.0, %v1421
      %v1423 = vpop.f32.mrf.mxu0
      %1424 = vmatprep.mubr.f32.mxu0 0.0
      %1425 = vmatmul.mubr.f32.gmra.mxu0 %v1300
      %v1426 = vpop.f32.mrf.mxu0
      %v1427 = vadd.f32 0.0, %v1426
      %v1428 = vpop.f32.mrf.mxu0
      %1429 = vmatprep.mubr.f32.mxu0 0.0
      %1430 = vmatmul.mubr.f32.gmra.mxu0 %v1302
      %v1431 = vpop.f32.mrf.mxu0
      %v1432 = vadd.f32 0.0, %v1431
      %v1433 = vpop.f32.mrf.mxu0
      %1434 = vmatprep.mubr.f32.mxu0 0.0
      %1435 = vmatmul.mubr.f32.gmra.mxu0 %v1304
      %v1436 = vpop.f32.mrf.mxu0
      %v1437 = vadd.f32 0.0, %v1436
      %v1438 = vpop.f32.mrf.mxu0
      %1439 = vmatprep.mubr.f32.mxu0 0.0
      %1440 = vmatmul.mubr.f32.gmra.mxu0 %v1306
      %v1441 = vpop.f32.mrf.mxu0
      %v1442 = vadd.f32 0.0, %v1441
      %v1443 = vpop.f32.mrf.mxu0
      %1444 = vmatprep.mubr.f32.mxu0 0.0
      %1445 = vmatmul.mubr.f32.gmra.mxu0 %v1308
      %v1446 = vpop.f32.mrf.mxu0
      %v1447 = vadd.f32 0.0, %v1446
      %v1448 = vpop.f32.mrf.mxu0
      %1449 = vmatprep.mubr.f32.mxu0 0.0
      %1450 = vmatmul.mubr.f32.gmra.mxu0 %v1310
      %v1451 = vpop.f32.mrf.mxu0
      %v1452 = vadd.f32 0.0, %v1451
      %v1453 = vpop.f32.mrf.mxu0
      %1454 = vmatprep.mubr.f32.mxu0 0.0
      %1455 = vmatmul.mubr.f32.gmra.mxu0 %v1313
      %v1456 = vpop.f32.mrf.mxu0
      %v1457 = vadd.f32 0.0, %v1456
      %v1458 = vpop.f32.mrf.mxu0
      %1459 = vdwg.mxu0
      %v1460 = vadd.f32 %v1227, %v1382
      %v1461 = vadd.f32 %v1228, %v1387
      %v1462 = vadd.f32 %v1229, %v1392
      %v1463 = vadd.f32 %v1230, %v1397
      %v1464 = vadd.f32 %v1231, %v1402
      %v1465 = vadd.f32 %v1232, %v1407
      %v1466 = vadd.f32 %v1233, %v1412
      %v1467 = vadd.f32 %v1234, %v1417
      %v1468 = vadd.f32 %v1235, %v1422
      %v1469 = vadd.f32 %v1236, %v1427
      %v1470 = vadd.f32 %v1237, %v1432
      %v1471 = vadd.f32 %v1238, %v1437
      %v1472 = vadd.f32 %v1239, %v1442
      %v1473 = vadd.f32 %v1240, %v1447
      %v1474 = vadd.f32 %v1241, %v1452
      %v1475 = vadd.f32 %v1242, %v1457
      %vm1476 = vcmask 1043456
      %v1477 = vrot.slane %v517, 4
      %v1478 = vrot.slane %v522, 4
      %v1479 = vsel %vm1476, %v1477, %v1478
      %v1480 = vrot.slane %v527, 4
      %v1481 = vsel %vm1476, %v1478, %v1480
      %v1482 = vrot.slane %v532, 4
      %v1483 = vsel %vm1476, %v1480, %v1482
      %v1484 = vrot.slane %v537, 4
      %v1485 = vsel %vm1476, %v1482, %v1484
      %v1486 = vrot.slane %v542, 4
      %v1487 = vsel %vm1476, %v1484, %v1486
      %v1488 = vrot.slane %v547, 4
      %v1489 = vsel %vm1476, %v1486, %v1488
      %v1490 = vrot.slane %v552, 4
      %v1491 = vsel %vm1476, %v1488, %v1490
      %v1492 = vrot.slane %v557, 4
      %v1493 = vsel %vm1476, %v1490, %v1492
      %v1494 = vrot.slane %v562, 4
      %v1495 = vsel %vm1476, %v1492, %v1494
      %v1496 = vrot.slane %v567, 4
      %v1497 = vsel %vm1476, %v1494, %v1496
      %v1498 = vrot.slane %v572, 4
      %v1499 = vsel %vm1476, %v1496, %v1498
      %v1500 = vrot.slane %v577, 4
      %v1501 = vsel %vm1476, %v1498, %v1500
      %v1502 = vrot.slane %v582, 4
      %v1503 = vsel %vm1476, %v1500, %v1502
      %v1504 = vrot.slane %v587, 4
      %v1505 = vsel %vm1476, %v1502, %v1504
      %v1506 = vrot.slane %v592, 4
      %v1507 = vsel %vm1476, %v1504, %v1506
      %v1509 = vsel %vm1476, %v1506, 0.0
      %s1510 = scalar_lea.vmem %s2, 128
      %v1511 = vld [vmem:[%s1510] sm:$0xff]
      %v1512 = vld [vmem:[%s1510 + $0x8] sm:$0xff]
      %v1513 = vld [vmem:[%s1510 + $0x10] sm:$0xff]
      %v1514 = vld [vmem:[%s1510 + $0x18] sm:$0xff]
      %v1515 = vsel %vm654, %v1479, 0
      %v1517 = vsel %vm654, %v1481, 0
      %v1519 = vsel %vm654, %v1483, 0
      %v1521 = vsel %vm654, %v1485, 0
      %v1523 = vsel %vm654, %v1487, 0
      %v1525 = vsel %vm654, %v1489, 0
      %v1527 = vsel %vm654, %v1491, 0
      %v1529 = vsel %vm654, %v1493, 0
      %v1531 = vsel %vm654, %v1495, 0
      %v1533 = vsel %vm654, %v1497, 0
      %v1535 = vsel %vm654, %v1499, 0
      %v1537 = vsel %vm654, %v1501, 0
      %v1539 = vsel %vm654, %v1503, 0
      %v1541 = vsel %vm654, %v1505, 0
      %v1543 = vsel %vm654, %v1507, 0
      %v1546 = vsel %vm654, %v1509, 0
      %1548 = vmatprep.subr.mxu0 0.0
      %1549 = vmatpush1.msra.mxu0 0.0
      %1550 = vmatprep.subr.mxu0 0.0
      %1551 = vmatpush1.msra.mxu0 0.0
      %1552 = vmatprep.subr.mxu0 0.0
      %1553 = vmatpush1.msra.mxu0 0.0
      %1554 = vmatprep.subr.mxu0 0.0
      %1555 = vmatpush1.msra.mxu0 0.0
      %1556 = vmatprep.subr.mxu0 0.0
      %1557 = vmatpush1.msra.mxu0 0.0
      %1558 = vmatprep.subr.mxu0 0.0
      %1559 = vmatpush1.msra.mxu0 0.0
      %1560 = vmatprep.subr.mxu0 0.0
      %1561 = vmatpush1.msra.mxu0 0.0
      %1562 = vmatprep.subr.mxu0 0.0
      %1563 = vmatpush1.msra.mxu0 0.0
      %1564 = vmatprep.subr.mxu0 0.0
      %1565 = vmatpush1.msra.mxu0 0.0
      %1566 = vmatprep.subr.mxu0 0.0
      %1567 = vmatpush1.msra.mxu0 0.0
      %1568 = vmatprep.subr.mxu0 0.0
      %1569 = vmatpush1.msra.mxu0 0.0
      %1570 = vmatprep.subr.mxu0 0.0
      %1571 = vmatpush1.msra.mxu0 0.0
      %1572 = vmatprep.subr.mxu0 0.0
      %1573 = vmatpush1.msra.mxu0 %v1514
      %1574 = vmatprep.subr.mxu0 0.0
      %1575 = vmatpush1.msra.mxu0 %v1513
      %1576 = vmatprep.subr.mxu0 0.0
      %1577 = vmatpush1.msra.mxu0 %v1512
      %1578 = vmatprep.subr.mxu0 0.0
      %1579 = vmatpush1.msra.mxu0 %v1511
      %1580 = vmatprep.subr.mxu0 0.0
      %1581 = vmatpush2.msra.mxu0 0.0
      %1582 = vmatprep.subr.mxu0 0.0
      %1583 = vmatpush2.msra.mxu0 0.0
      %1584 = vmatprep.subr.mxu0 0.0
      %1585 = vmatpush2.msra.mxu0 0.0
      %1586 = vmatprep.subr.mxu0 0.0
      %1587 = vmatpush2.msra.mxu0 0.0
      %1588 = vmatprep.subr.mxu0 0.0
      %1589 = vmatpush2.msra.mxu0 0.0
      %1590 = vmatprep.subr.mxu0 0.0
      %1591 = vmatpush2.msra.mxu0 0.0
      %1592 = vmatprep.subr.mxu0 0.0
      %1593 = vmatpush2.msra.mxu0 0.0
      %1594 = vmatprep.subr.mxu0 0.0
      %1595 = vmatpush2.msra.mxu0 0.0
      %1596 = vmatprep.subr.mxu0 0.0
      %1597 = vmatpush2.msra.mxu0 0.0
      %1598 = vmatprep.subr.mxu0 0.0
      %1599 = vmatpush2.msra.mxu0 0.0
      %1600 = vmatprep.subr.mxu0 0.0
      %1601 = vmatpush2.msra.mxu0 0.0
      %1602 = vmatprep.subr.mxu0 0.0
      %1603 = vmatpush2.msra.mxu0 0.0
      %1604 = vmatprep.subr.mxu0 0.0
      %1605 = vmatpush2.msra.mxu0 0.0
      %1606 = vmatprep.subr.mxu0 0.0
      %1607 = vmatpush2.msra.mxu0 0.0
      %1608 = vmatprep.subr.mxu0 0.0
      %1609 = vmatpush2.msra.mxu0 0.0
      %1610 = vmatprep.subr.mxu0 0.0
      %1611 = vmatpush2.msra.mxu0 0.0
      %1612 = vmatprep.mubr.f32.mxu0 0.0
      %1613 = vmatmul.mubr.f32.gmra.mxu0 %v1515
      %v1614 = vpop.f32.mrf.mxu0
      %v1615 = vadd.f32 0.0, %v1614
      %v1616 = vpop.f32.mrf.mxu0
      %1617 = vmatprep.mubr.f32.mxu0 0.0
      %1618 = vmatmul.mubr.f32.gmra.mxu0 %v1517
      %v1619 = vpop.f32.mrf.mxu0
      %v1620 = vadd.f32 0.0, %v1619
      %v1621 = vpop.f32.mrf.mxu0
      %1622 = vmatprep.mubr.f32.mxu0 0.0
      %1623 = vmatmul.mubr.f32.gmra.mxu0 %v1519
      %v1624 = vpop.f32.mrf.mxu0
      %v1625 = vadd.f32 0.0, %v1624
      %v1626 = vpop.f32.mrf.mxu0
      %1627 = vmatprep.mubr.f32.mxu0 0.0
      %1628 = vmatmul.mubr.f32.gmra.mxu0 %v1521
      %v1629 = vpop.f32.mrf.mxu0
      %v1630 = vadd.f32 0.0, %v1629
      %v1631 = vpop.f32.mrf.mxu0
      %1632 = vmatprep.mubr.f32.mxu0 0.0
      %1633 = vmatmul.mubr.f32.gmra.mxu0 %v1523
      %v1634 = vpop.f32.mrf.mxu0
      %v1635 = vadd.f32 0.0, %v1634
      %v1636 = vpop.f32.mrf.mxu0
      %1637 = vmatprep.mubr.f32.mxu0 0.0
      %1638 = vmatmul.mubr.f32.gmra.mxu0 %v1525
      %v1639 = vpop.f32.mrf.mxu0
      %v1640 = vadd.f32 0.0, %v1639
      %v1641 = vpop.f32.mrf.mxu0
      %1642 = vmatprep.mubr.f32.mxu0 0.0
      %1643 = vmatmul.mubr.f32.gmra.mxu0 %v1527
      %v1644 = vpop.f32.mrf.mxu0
      %v1645 = vadd.f32 0.0, %v1644
      %v1646 = vpop.f32.mrf.mxu0
      %1647 = vmatprep.mubr.f32.mxu0 0.0
      %1648 = vmatmul.mubr.f32.gmra.mxu0 %v1529
      %v1649 = vpop.f32.mrf.mxu0
      %v1650 = vadd.f32 0.0, %v1649
      %v1651 = vpop.f32.mrf.mxu0
      %1652 = vmatprep.mubr.f32.mxu0 0.0
      %1653 = vmatmul.mubr.f32.gmra.mxu0 %v1531
      %v1654 = vpop.f32.mrf.mxu0
      %v1655 = vadd.f32 0.0, %v1654
      %v1656 = vpop.f32.mrf.mxu0
      %1657 = vmatprep.mubr.f32.mxu0 0.0
      %1658 = vmatmul.mubr.f32.gmra.mxu0 %v1533
      %v1659 = vpop.f32.mrf.mxu0
      %v1660 = vadd.f32 0.0, %v1659
      %v1661 = vpop.f32.mrf.mxu0
      %1662 = vmatprep.mubr.f32.mxu0 0.0
      %1663 = vmatmul.mubr.f32.gmra.mxu0 %v1535
      %v1664 = vpop.f32.mrf.mxu0
      %v1665 = vadd.f32 0.0, %v1664
      %v1666 = vpop.f32.mrf.mxu0
      %1667 = vmatprep.mubr.f32.mxu0 0.0
      %1668 = vmatmul.mubr.f32.gmra.mxu0 %v1537
      %v1669 = vpop.f32.mrf.mxu0
      %v1670 = vadd.f32 0.0, %v1669
      %v1671 = vpop.f32.mrf.mxu0
      %1672 = vmatprep.mubr.f32.mxu0 0.0
      %1673 = vmatmul.mubr.f32.gmra.mxu0 %v1539
      %v1674 = vpop.f32.mrf.mxu0
      %v1675 = vadd.f32 0.0, %v1674
      %v1676 = vpop.f32.mrf.mxu0
      %1677 = vmatprep.mubr.f32.mxu0 0.0
      %1678 = vmatmul.mubr.f32.gmra.mxu0 %v1541
      %v1679 = vpop.f32.mrf.mxu0
      %v1680 = vadd.f32 0.0, %v1679
      %v1681 = vpop.f32.mrf.mxu0
      %1682 = vmatprep.mubr.f32.mxu0 0.0
      %1683 = vmatmul.mubr.f32.gmra.mxu0 %v1543
      %v1684 = vpop.f32.mrf.mxu0
      %v1685 = vadd.f32 0.0, %v1684
      %v1686 = vpop.f32.mrf.mxu0
      %1687 = vmatprep.mubr.f32.mxu0 0.0
      %1688 = vmatmul.mubr.f32.gmra.mxu0 %v1546
      %v1689 = vpop.f32.mrf.mxu0
      %v1690 = vadd.f32 0.0, %v1689
      %v1691 = vpop.f32.mrf.mxu0
      %1692 = vdwg.mxu0
      %v1693 = vadd.f32 %v1460, %v1615
      %v1694 = vadd.f32 %v1461, %v1620
      %v1695 = vadd.f32 %v1462, %v1625
      %v1696 = vadd.f32 %v1463, %v1630
      %v1697 = vadd.f32 %v1464, %v1635
      %v1698 = vadd.f32 %v1465, %v1640
      %v1699 = vadd.f32 %v1466, %v1645
      %v1700 = vadd.f32 %v1467, %v1650
      %v1701 = vadd.f32 %v1468, %v1655
      %v1702 = vadd.f32 %v1469, %v1660
      %v1703 = vadd.f32 %v1470, %v1665
      %v1704 = vadd.f32 %v1471, %v1670
      %v1705 = vadd.f32 %v1472, %v1675
      %v1706 = vadd.f32 %v1473, %v1680
      %v1707 = vadd.f32 %v1474, %v1685
      %v1708 = vadd.f32 %v1475, %v1690
      %v1709 = vld [vmem:[%s3] sm:$0x1]
      %v1711 = vlaneseq
      %v1712 = vshrl.u32 %v1711, 7
      %v1713 = vsub.s32 0, %v1712
      %v1714 = vrot.slane %v1709, %v1713
      %v1716 = vadd.f32 %v1693, %v1714
      %v1717 = vadd.f32 %v1694, %v1714
      %v1718 = vadd.f32 %v1695, %v1714
      %v1719 = vadd.f32 %v1696, %v1714
      %v1720 = vadd.f32 %v1697, %v1714
      %v1721 = vadd.f32 %v1698, %v1714
      %v1722 = vadd.f32 %v1699, %v1714
      %v1723 = vadd.f32 %v1700, %v1714
      %v1724 = vadd.f32 %v1701, %v1714
      %v1725 = vadd.f32 %v1702, %v1714
      %v1726 = vadd.f32 %v1703, %v1714
      %v1727 = vadd.f32 %v1704, %v1714
      %v1728 = vadd.f32 %v1705, %v1714
      %v1729 = vadd.f32 %v1706, %v1714
      %v1730 = vadd.f32 %v1707, %v1714
      %v1731 = vadd.f32 %v1708, %v1714
      %v1732 = vmax.f32 %v1716, 0.0
      %v1733 = vmax.f32 %v1717, 0.0
      %v1734 = vmax.f32 %v1718, 0.0
      %v1735 = vmax.f32 %v1719, 0.0
      %v1736 = vmax.f32 %v1720, 0.0
      %v1737 = vmax.f32 %v1721, 0.0
      %v1738 = vmax.f32 %v1722, 0.0
      %v1739 = vmax.f32 %v1723, 0.0
      %v1740 = vmax.f32 %v1724, 0.0
      %v1741 = vmax.f32 %v1725, 0.0
      %v1742 = vmax.f32 %v1726, 0.0
      %v1743 = vmax.f32 %v1727, 0.0
      %v1744 = vmax.f32 %v1728, 0.0
      %v1745 = vmax.f32 %v1729, 0.0
      %v1746 = vmax.f32 %v1730, 0.0
      %v1747 = vmax.f32 %v1731, 0.0
      %v1748 = vld [vmem:[%s4] sm:$0xff]
      %v1749 = vld [vmem:[%s4 + $0x8] sm:$0xff]
      %v1750 = vadd.f32 %v1732, %v1748
      %v1751 = vadd.f32 %v1733, %v1749
      %v1752 = vadd.f32 %v1734, %v1748
      %v1753 = vadd.f32 %v1735, %v1749
      %v1754 = vadd.f32 %v1736, %v1748
      %v1755 = vadd.f32 %v1737, %v1749
      %v1756 = vadd.f32 %v1738, %v1748
      %v1757 = vadd.f32 %v1739, %v1749
      %v1758 = vadd.f32 %v1740, %v1748
      %v1759 = vadd.f32 %v1741, %v1749
      %v1760 = vadd.f32 %v1742, %v1748
      %v1761 = vadd.f32 %v1743, %v1749
      %v1762 = vadd.f32 %v1744, %v1748
      %v1763 = vadd.f32 %v1745, %v1749
      %v1764 = vadd.f32 %v1746, %v1748
      %v1765 = vadd.f32 %v1747, %v1749
      %vm1766 = vcmask 392192
      %v1767 = vsel %vm1766, %v1750, -inf
      %v1768 = vsel %vm1766, %v1751, -inf
      %v1769 = vmax.f32 %v1767, %v1768
      %v1770 = vrot.slane %v1769, 4
      %v1771 = vmax.f32 %v1769, %v1770
      %v1772 = vrot.slane %v1771, 2
      %v1773 = vmax.f32 %v1771, %v1772
      %v1774 = vrot.slane %v1773, 1
      %v1775 = vmax.f32 %v1773, %v1774
      %v1776 = vsel %vm1766, %v1752, -inf
      %v1777 = vsel %vm1766, %v1753, -inf
      %v1778 = vmax.f32 %v1776, %v1777
      %v1779 = vrot.slane %v1778, 4
      %v1780 = vmax.f32 %v1778, %v1779
      %v1781 = vrot.slane %v1780, 2
      %v1782 = vmax.f32 %v1780, %v1781
      %v1783 = vrot.slane %v1782, 1
      %v1784 = vmax.f32 %v1782, %v1783
      %v1785 = vsel %vm1766, %v1754, -inf
      %v1786 = vsel %vm1766, %v1755, -inf
      %v1787 = vmax.f32 %v1785, %v1786
      %v1788 = vrot.slane %v1787, 4
      %v1789 = vmax.f32 %v1787, %v1788
      %v1790 = vrot.slane %v1789, 2
      %v1791 = vmax.f32 %v1789, %v1790
      %v1792 = vrot.slane %v1791, 1
      %v1793 = vmax.f32 %v1791, %v1792
      %v1794 = vsel %vm1766, %v1756, -inf
      %v1795 = vsel %vm1766, %v1757, -inf
      %v1796 = vmax.f32 %v1794, %v1795
      %v1797 = vrot.slane %v1796, 4
      %v1798 = vmax.f32 %v1796, %v1797
      %v1799 = vrot.slane %v1798, 2
      %v1800 = vmax.f32 %v1798, %v1799
      %v1801 = vrot.slane %v1800, 1
      %v1802 = vmax.f32 %v1800, %v1801
      %v1803 = vsel %vm1766, %v1758, -inf
      %v1804 = vsel %vm1766, %v1759, -inf
      %v1805 = vmax.f32 %v1803, %v1804
      %v1806 = vrot.slane %v1805, 4
      %v1807 = vmax.f32 %v1805, %v1806
      %v1808 = vrot.slane %v1807, 2
      %v1809 = vmax.f32 %v1807, %v1808
      %v1810 = vrot.slane %v1809, 1
      %v1811 = vmax.f32 %v1809, %v1810
      %v1812 = vsel %vm1766, %v1760, -inf
      %v1813 = vsel %vm1766, %v1761, -inf
      %v1814 = vmax.f32 %v1812, %v1813
      %v1815 = vrot.slane %v1814, 4
      %v1816 = vmax.f32 %v1814, %v1815
      %v1817 = vrot.slane %v1816, 2
      %v1818 = vmax.f32 %v1816, %v1817
      %v1819 = vrot.slane %v1818, 1
      %v1820 = vmax.f32 %v1818, %v1819
      %v1821 = vsel %vm1766, %v1762, -inf
      %v1822 = vsel %vm1766, %v1763, -inf
      %v1823 = vmax.f32 %v1821, %v1822
      %v1824 = vrot.slane %v1823, 4
      %v1825 = vmax.f32 %v1823, %v1824
      %v1826 = vrot.slane %v1825, 2
      %v1827 = vmax.f32 %v1825, %v1826
      %v1828 = vrot.slane %v1827, 1
      %v1829 = vmax.f32 %v1827, %v1828
      %v1830 = vsel %vm1766, %v1764, -inf
      %v1831 = vsel %vm1766, %v1765, -inf
      %v1832 = vmax.f32 %v1830, %v1831
      %v1833 = vrot.slane %v1832, 4
      %v1834 = vmax.f32 %v1832, %v1833
      %v1835 = vrot.slane %v1834, 2
      %v1836 = vmax.f32 %v1834, %v1835
      %v1837 = vrot.slane %v1836, 1
      %v1838 = vmax.f32 %v1836, %v1837
      %v1839 = vld [vmem:[%s5] sm:$0xff]
      %v1840 = vld [vmem:[%s5 + $0x8] sm:$0xff]
      %v1841 = vld [vmem:[%s5 + $0x10] sm:$0xff]
      %v1842 = vld [vmem:[%s5 + $0x18] sm:$0xff]
      %v1843 = vld [vmem:[%s5 + $0x20] sm:$0xff]
      %v1844 = vld [vmem:[%s5 + $0x28] sm:$0xff]
      %v1845 = vld [vmem:[%s6] sm:$0x1]
      %v1847 = vlaneseq
      %v1848 = vshrl.u32 %v1847, 7
      %v1849 = vsub.s32 0, %v1848
      %v1850 = vrot.slane %v1845, %v1849
      %vm1860 = vcmask 1041409
      %v1861 = vsel %vm1860, %v1784, %v1775
      %vm1862 = vcmask 1042434
      %v1863 = vsel %vm1862, %v1793, %v1861
      %vm1864 = vcmask 1043459
      %v1865 = vsel %vm1864, %v1802, %v1863
      %vm1866 = vcmask 1044484
      %v1867 = vsel %vm1866, %v1811, %v1865
      %vm1868 = vcmask 1045509
      %v1869 = vsel %vm1868, %v1820, %v1867
      %vm1870 = vcmask 1046534
      %v1871 = vsel %vm1870, %v1829, %v1869
      %vm1872 = vcmask 1047559
      %v1873 = vsel %vm1872, %v1838, %v1871
      %v1874 = vsel %vm1766, %v1873, 0
      %1876 = vmatprep.subr.mxu0 0.0
      %1877 = vmatpush1.msra.mxu0 0.0
      %1878 = vmatprep.subr.mxu0 0.0
      %1879 = vmatpush1.msra.mxu0 0.0
      %1880 = vmatprep.subr.mxu0 0.0
      %1881 = vmatpush1.msra.mxu0 0.0
      %1882 = vmatprep.subr.mxu0 0.0
      %1883 = vmatpush1.msra.mxu0 0.0
      %1884 = vmatprep.subr.mxu0 0.0
      %1885 = vmatpush1.msra.mxu0 0.0
      %1886 = vmatprep.subr.mxu0 0.0
      %1887 = vmatpush1.msra.mxu0 0.0
      %1888 = vmatprep.subr.mxu0 0.0
      %1889 = vmatpush1.msra.mxu0 0.0
      %1890 = vmatprep.subr.mxu0 0.0
      %1891 = vmatpush1.msra.mxu0 0.0
      %1892 = vmatprep.subr.mxu0 0.0
      %1893 = vmatpush1.msra.mxu0 0.0
      %1894 = vmatprep.subr.mxu0 0.0
      %1895 = vmatpush1.msra.mxu0 0.0
      %1896 = vmatprep.subr.mxu0 0.0
      %1897 = vmatpush1.msra.mxu0 %v1844
      %1898 = vmatprep.subr.mxu0 0.0
      %1899 = vmatpush1.msra.mxu0 %v1843
      %1900 = vmatprep.subr.mxu0 0.0
      %1901 = vmatpush1.msra.mxu0 %v1842
      %1902 = vmatprep.subr.mxu0 0.0
      %1903 = vmatpush1.msra.mxu0 %v1841
      %1904 = vmatprep.subr.mxu0 0.0
      %1905 = vmatpush1.msra.mxu0 %v1840
      %1906 = vmatprep.subr.mxu0 0.0
      %1907 = vmatpush1.msra.mxu0 %v1839
      %1908 = vmatprep.subr.mxu0 0.0
      %1909 = vmatpush2.msra.mxu0 0.0
      %1910 = vmatprep.subr.mxu0 0.0
      %1911 = vmatpush2.msra.mxu0 0.0
      %1912 = vmatprep.subr.mxu0 0.0
      %1913 = vmatpush2.msra.mxu0 0.0
      %1914 = vmatprep.subr.mxu0 0.0
      %1915 = vmatpush2.msra.mxu0 0.0
      %1916 = vmatprep.subr.mxu0 0.0
      %1917 = vmatpush2.msra.mxu0 0.0
      %1918 = vmatprep.subr.mxu0 0.0
      %1919 = vmatpush2.msra.mxu0 0.0
      %1920 = vmatprep.subr.mxu0 0.0
      %1921 = vmatpush2.msra.mxu0 0.0
      %1922 = vmatprep.subr.mxu0 0.0
      %1923 = vmatpush2.msra.mxu0 0.0
      %1924 = vmatprep.subr.mxu0 0.0
      %1925 = vmatpush2.msra.mxu0 0.0
      %1926 = vmatprep.subr.mxu0 0.0
      %1927 = vmatpush2.msra.mxu0 0.0
      %1928 = vmatprep.subr.mxu0 0.0
      %1929 = vmatpush2.msra.mxu0 0.0
      %1930 = vmatprep.subr.mxu0 0.0
      %1931 = vmatpush2.msra.mxu0 0.0
      %1932 = vmatprep.subr.mxu0 0.0
      %1933 = vmatpush2.msra.mxu0 0.0
      %1934 = vmatprep.subr.mxu0 0.0
      %1935 = vmatpush2.msra.mxu0 0.0
      %1936 = vmatprep.subr.mxu0 0.0
      %1937 = vmatpush2.msra.mxu0 0.0
      %1938 = vmatprep.subr.mxu0 0.0
      %1939 = vmatpush2.msra.mxu0 0.0
      %1940 = vmatprep.mubr.f32.mxu0 0.0
      %1941 = vmatmul.mubr.f32.gmra.mxu0 %v1874
      %v1942 = vpop.f32.mrf.mxu0
      %v1943 = vadd.f32 %v1850, %v1942
      %v1944 = vpop.f32.mrf.mxu0
      %1945 = vdwg.mxu0
      %vm1946 = vcmask 64512
      %1947 = vst.msk [vmem:[%s278] sm:$0xff] %vm1946, %v1943
      %p1948 = scmp.lt.s32.totalorder %s18, 1
      %s1949 = scalar_select %p1948, %s18, 1
      %s1950 = smul.addr %s1949, 8
      %s1951 = scalar_lea.vmem %s7, %s1950
      // Predicated region
      $region49: #{tpu_custom_call.1} parent=47 // pred_check
        %p1952 = pneg %p188
      $region50: #{tpu_custom_call.1} parent=47 // pred_check_branch
        %1954 = sbr.rel (%p1952) target = $region52
      $region51: #{tpu_custom_call.1} parent=47 // pred_region
        _
      $region52: #{tpu_custom_call.1} parent=47 // pred_fallthru
        _
    $region48: #{tpu_custom_call.1} parent=5 // pred_fallthru
      _
    %p1955 = scmp.le.s32.totalorder 2, %s13
    // Predicated region
    $region53: #{tpu_custom_call.1} parent=5 // pred_check
      %p1956 = pneg %p1955
    $region54: #{tpu_custom_call.1} parent=5 // pred_check_branch
      %1958 = sbr.rel (%p1956) target = $region56
    $region55: #{tpu_custom_call.1} parent=5 // pred_region
      %s1959 = ssub.s32 %s13, 2
      // Predicated region
      $region57: #{tpu_custom_call.1} parent=55 // pred_check
        %p1960 = pneg %p194
      $region58: #{tpu_custom_call.1} parent=55 // pred_check_branch
        %1962 = sbr.rel (%p1960) target = $region60
      $region59: #{tpu_custom_call.1} parent=55 // pred_region
        %p1963 = scmp.lt.s32.totalorder %s19, 1
        %s1964 = scalar_select %p1963, %s19, 1
        %s1965 = smul.addr %s1964, 8
        %s1966 = scalar_lea.vmem %s7, %s1965
      $region60: #{tpu_custom_call.1} parent=55 // pred_fallthru
        _
    $region56: #{tpu_custom_call.1} parent=5 // pred_fallthru
      _
  $region6: #{tpu_custom_call.1} parent=0 // loop_footer
    %s17 = sadd.s32 1, %s13
  $region7: #{tpu_custom_call.1} parent=0 // loop_footer_branch
    %12 = sbr.rel target = $region3
  $region8: #{tpu_custom_call.1} parent=0 // loop_exit
    _

</llo_original>
